<compile_context>
chip_gen: v5e
topology: v5e:2x2
jax: 0.10.0
libtpu: 0.0.40
codegen_flags: <defaults>
</compile_context>

<pallas_src>
import functools

import jax
import jax.numpy as jnp
import numpy as np
from jax.experimental import pallas as pl
from jax.experimental.pallas import tpu as pltpu


# ----------------------------- Fused Pallas kernel -------------------------- #

def _fused_forward_kernel(x_ref, w_dim_ref, b_dim_ref,
                          w_gi_ref, b_gi_ref,
                          w_hh_ref, b_hh_ref,
                          w_feat_ref, b_feat_ref,
                          out_ref, feat_ref,
                          *, t_steps, batch, hp):
    # x:      [(T+1)*B, 1000] bf16   (rows 0..T*B-1 = sequence, last B = itensor)
    # w_dim:  [1000, D] bf16,  b_dim: [1, D] f32
    # w_gi:   [D, 4*HP] bf16 = [w_ih(r|z|n) | w_init],  b_gi: [1, 4*HP] f32
    # w_hh:   [HP, 3*HP] bf16, b_hh: [1, 3*HP] f32      (gate order r, z, n)
    # w_feat: [HP, FP] bf16,   b_feat: [1, FP] f32
    # out:    [T*B, HP] f32,   feat: [B, FP] f32

    # ---- 1) dimred for sequence AND conditioning tensor: one bf16 MXU pass --
    x_red = (jnp.dot(x_ref[...], w_dim_ref[...],
                     preferred_element_type=jnp.float32)
             + b_dim_ref[...])                                # [(T+1)*B, D] f32

    # ---- 2) hoisted input->gate matmul fused with the h0 projection ---------
    big = (jnp.dot(x_red.astype(jnp.bfloat16), w_gi_ref[...],
                   preferred_element_type=jnp.float32)
           + b_gi_ref[...])                                   # [(T+1)*B, 4*HP]

    gi_all = big[:t_steps * batch, :3 * hp]                   # per-step gate pre-acts
    h = jnp.tanh(big[t_steps * batch:, 3 * hp:])              # [B, HP] h0 (pad lanes 0)

    b_hh = b_hh_ref[...]

    # ---- 3) GRU recurrence: static unroll, h carried in vregs (no scratch) --
    outs = []
    for t in range(t_steps):
        gi = gi_all[t * batch:(t + 1) * batch, :]             # [B, 3*HP] (vreg slice)
        gh = (jnp.dot(h.astype(jnp.bfloat16), w_hh_ref[...],
                      preferred_element_type=jnp.float32)
              + b_hh)                                         # [B, 3*HP]
        # all gate slices sit at 128-lane boundaries
        r = jax.nn.sigmoid(gi[:, 0:hp] + gh[:, 0:hp])
        z = jax.nn.sigmoid(gi[:, hp:2 * hp] + gh[:, hp:2 * hp])
        n = jnp.tanh(gi[:, 2 * hp:3 * hp] + r * gh[:, 2 * hp:3 * hp])
        h = (1.0 - z) * n + z * h
        outs.append(h)

    # ---- 4) ONE lane-dense store of the whole padded output sequence --------
    out_ref[...] = jnp.concatenate(outs, axis=0)              # [T*B, HP] f32

    # ---- 5) feature head of the final hidden state (lane-dense, padded) -----
    feat_ref[...] = (jnp.dot(h.astype(jnp.bfloat16), w_feat_ref[...],
                             preferred_element_type=jnp.float32)
                     + b_feat_ref[...])                       # [B, FP] f32


# ------------------------------ Model wrapper ------------------------------ #

def _round_up(x, m):
    return ((x + m - 1) // m) * m


class AppearanceModelPallas:
    def __init__(self, key, input_dim=32, rnn_hdim=32, feature_dim=16):
        self.input_dim = input_dim
        self.hidden_dim = rnn_hdim
        self.feature_dim = feature_dim
        self.k_in = 1000
        self.hp = _round_up(rnn_hdim, 128)                     # 32  -> 128
        self.fp = _round_up(feature_dim, 128)                  # 16  -> 128
        ks = jax.random.split(key, 8)

        def init(k, shape, fan_in):
            return (jax.random.normal(k, shape, jnp.float32)
                    / jnp.sqrt(jnp.float32(fan_in)))

        # ---- logical (unpadded, f32) parameters — used by the reference ----
        self.w_dim = init(ks[0], (self.k_in, input_dim), self.k_in)
        self.b_dim = init(ks[1], (1, input_dim), self.k_in)
        self.w_init = init(ks[2], (input_dim, rnn_hdim), input_dim)
        self.b_init = init(ks[3], (1, rnn_hdim), input_dim)
        self.w_ih = init(ks[4], (input_dim, 3 * rnn_hdim), input_dim)
        self.w_hh = init(ks[5], (rnn_hdim, 3 * rnn_hdim), rnn_hdim)
        self.b_ih = jnp.zeros((1, 3 * rnn_hdim), jnp.float32)
        self.b_hh = jnp.zeros((1, 3 * rnn_hdim), jnp.float32)
        self.w_feat = init(ks[6], (rnn_hdim, feature_dim), rnn_hdim)
        self.b_feat = init(ks[7], (1, feature_dim), rnn_hdim)

        # ---- padded / bf16 parameters for the fused kernel ------------------
        h, hp, fp = rnn_hdim, self.hp, self.fp

        def pad_rows(w, new_rows):
            return jnp.zeros((new_rows, w.shape[1]), w.dtype).at[:w.shape[0]].set(w)

        def pad_cols(w, new_cols):
            return jnp.zeros((w.shape[0], new_cols), w.dtype).at[:, :w.shape[1]].set(w)

        def pad_gates(w):
            # [in, 3h] -> [in, 3hp]; each gate block starts at a 128-lane boundary
            out = jnp.zeros((w.shape[0], 3 * hp), w.dtype)
            for g in range(3):
                out = out.at[:, g * hp:g * hp + h].set(w[:, g * h:(g + 1) * h])
            return out

        # dimred weight: bf16, no K padding (Mosaic handles K=1000)
        self.w_dim_bf = self.w_dim.astype(jnp.bfloat16)
        # fused [w_ih(r|z|n) | w_init] RHS and its bias (zero padding keeps the
        # padded hidden lanes identically zero through the whole recurrence)
        self.w_gi = jnp.concatenate(
            [pad_gates(self.w_ih), pad_cols(self.w_init, hp)],
            axis=1).astype(jnp.bfloat16)                       # [D, 4*HP]
        self.b_gi = jnp.concatenate(
            [pad_gates(self.b_ih), pad_cols(self.b_init, hp)], axis=1)  # [1, 4*HP]
        self.w_hh_p = pad_rows(pad_gates(self.w_hh), hp).astype(jnp.bfloat16)
        self.b_hh_p = pad_gates(self.b_hh)
        self.w_feat_p = pad_cols(pad_rows(self.w_feat, hp), fp).astype(jnp.bfloat16)
        self.b_feat_p = pad_cols(self.b_feat, fp)

    # ---------------------------- Pallas forward ---------------------------- #

    def forward(self, isequence, itensor):
        # isequence: [T, B, 1000], itensor: [B, 1000]
        t_steps, batch, k = isequence.shape
        # one reshape+concat+cast; no jnp.pad / no HBM rewrite of the big tensor
        x_all = jnp.concatenate(
            [isequence.reshape(t_steps * batch, k), itensor],
            axis=0).astype(jnp.bfloat16)                       # [(T+1)*B, 1000]

        kernel = functools.partial(_fused_forward_kernel,
                                   t_steps=t_steps, batch=batch, hp=self.hp)
        vmem = pl.BlockSpec(memory_space=pltpu.MemorySpace.VMEM)

        out_pad, feat_pad = pl.pallas_call(
            kernel,
            out_shape=(
                jax.ShapeDtypeStruct((t_steps * batch, self.hp), jnp.float32),
                jax.ShapeDtypeStruct((batch, self.fp), jnp.float32),
            ),
            in_specs=[vmem] * 9,
            out_specs=(vmem, vmem),
            compiler_params=pltpu.CompilerParams(
                vmem_limit_bytes=32 * 1024 * 1024),
        )(x_all,
          self.w_dim_bf, self.b_dim,
          self.w_gi, self.b_gi,
          self.w_hh_p, self.b_hh_p,
          self.w_feat_p, self.b_feat_p)

        # pad-lane removal in the wrapper (nearly free)
        out_seq = out_pad.reshape(t_steps, batch, self.hp)[:, :, :self.hidden_dim]
        features = feat_pad[:, :self.feature_dim]
        return out_seq, features

    # Pure-JAX reference (same math, unpadded f32) for a sanity check.
    def reference(self, isequence, itensor):
        t_steps, _, _ = isequence.shape
        seq_red = isequence @ self.w_dim + self.b_dim
        ten_red = itensor @ self.w_dim + self.b_dim
        h = jnp.tanh(ten_red @ self.w_init + self.b_init)
        hdim = self.hidden_dim
        outs = []
        for t in range(t_steps):
            gi = seq_red[t] @ self.w_ih + self.b_ih
            gh = h @ self.w_hh + self.b_hh
            r = jax.nn.sigmoid(gi[:, :hdim] + gh[:, :hdim])
            z = jax.nn.sigmoid(gi[:, hdim:2 * hdim] + gh[:, hdim:2 * hdim])
            n = jnp.tanh(gi[:, 2 * hdim:] + r * gh[:, 2 * hdim:])
            h = (1.0 - z) * n + z * h
            outs.append(h)
        out_seq = jnp.stack(outs, axis=0)
        features = h @ self.w_feat + self.b_feat
        return out_seq, features


# --------------------------------- Driver ---------------------------------- #

if __name__ == "__main__":
    key = jax.random.PRNGKey(0)
    k_model, k_seq, k_ten = jax.random.split(key, 3)

    T, B = 8, 2
    model = AppearanceModelPallas(k_model, input_dim=32, rnn_hdim=32,
                                  feature_dim=16)

    isequence = jax.random.normal(k_seq, (T, B, 1000), jnp.float32)
    itensor = jax.random.normal(k_ten, (B, 1000), jnp.float32)

    out_seq, features = model.forward(isequence, itensor)
    out_seq, features = jax.block_until_ready((out_seq, features))

    ref_seq, ref_feat = model.reference(isequence, itensor)
    # bf16 MXU operands over the K=1000 dimred contraction give ~1e-2-level
    # absolute error on O(1) values; tolerance documents that.
    np.testing.assert_allclose(np.asarray(out_seq), np.asarray(ref_seq),
                               rtol=3e-2, atol=3e-2)
    np.testing.assert_allclose(np.asarray(features), np.asarray(ref_feat),
                               rtol=3e-2, atol=3e-2)

    assert out_seq.shape == (T, B, 32) and features.shape == (B, 16)
    print("KERNEL_OK")
</pallas_src>

<mosaic_0001>
module attributes {stable_mosaic.version = 11 : i64} {
  func.func @_fused_forward_kernel(%arg0: memref<18x1000xbf16, #tpu.memory_space<vmem>>, %arg1: memref<1000x32xbf16, #tpu.memory_space<vmem>>, %arg2: memref<1x32xf32, #tpu.memory_space<vmem>>, %arg3: memref<32x512xbf16, #tpu.memory_space<vmem>>, %arg4: memref<1x512xf32, #tpu.memory_space<vmem>>, %arg5: memref<128x384xbf16, #tpu.memory_space<vmem>>, %arg6: memref<1x384xf32, #tpu.memory_space<vmem>>, %arg7: memref<128x128xbf16, #tpu.memory_space<vmem>>, %arg8: memref<1x128xf32, #tpu.memory_space<vmem>>, %arg9: memref<16x128xf32, #tpu.memory_space<vmem>>, %arg10: memref<2x128xf32, #tpu.memory_space<vmem>>) attributes {dimension_semantics = [], scalar_prefetch = 0 : i64, scratch_operands = 0 : i64, tpu.core_type = #tpu.core_type<tc>} {
    %c0 = arith.constant 0 : index
    %c0_0 = arith.constant 0 : index
    %0 = vector.load %arg0[%c0, %c0_0] : memref<18x1000xbf16, #tpu.memory_space<vmem>>, vector<18x1000xbf16>
    %c0_1 = arith.constant 0 : index
    %c0_2 = arith.constant 0 : index
    %1 = vector.load %arg1[%c0_1, %c0_2] : memref<1000x32xbf16, #tpu.memory_space<vmem>>, vector<1000x32xbf16>
    %cst = arith.constant dense<0.000000e+00> : vector<18x32xf32>
    %2 = tpu.matmul %0, %1, %cst {dimension_numbers = #tpu.dot_dimension_numbers<[1], [0], [0], [1], [0, 0, 1, 1], [], []>} : vector<18x1000xbf16>, vector<1000x32xbf16>, vector<18x32xf32> -> vector<18x32xf32>
    %c0_3 = arith.constant 0 : index
    %c0_4 = arith.constant 0 : index
    %3 = vector.load %arg2[%c0_3, %c0_4] : memref<1x32xf32, #tpu.memory_space<vmem>>, vector<1x32xf32>
    %4 = vector.broadcast %3 : vector<1x32xf32> to vector<18x32xf32>
    %5 = arith.addf %2, %4 : vector<18x32xf32>
    %6 = arith.truncf %5 : vector<18x32xf32> to vector<18x32xbf16>
    %c0_5 = arith.constant 0 : index
    %c0_6 = arith.constant 0 : index
    %7 = vector.load %arg3[%c0_5, %c0_6] : memref<32x512xbf16, #tpu.memory_space<vmem>>, vector<32x512xbf16>
    %cst_7 = arith.constant dense<0.000000e+00> : vector<18x512xf32>
    %8 = tpu.matmul %6, %7, %cst_7 {dimension_numbers = #tpu.dot_dimension_numbers<[1], [0], [0], [1], [0, 0, 1, 1], [], []>} : vector<18x32xbf16>, vector<32x512xbf16>, vector<18x512xf32> -> vector<18x512xf32>
    %c0_8 = arith.constant 0 : index
    %c0_9 = arith.constant 0 : index
    %9 = vector.load %arg4[%c0_8, %c0_9] : memref<1x512xf32, #tpu.memory_space<vmem>>, vector<1x512xf32>
    %10 = vector.broadcast %9 : vector<1x512xf32> to vector<18x512xf32>
    %11 = arith.addf %8, %10 : vector<18x512xf32>
    %12 = vector.extract_strided_slice %11 {offsets = [0, 0], sizes = [16, 384], strides = [1, 1]} : vector<18x512xf32> to vector<16x384xf32>
    %13 = vector.extract_strided_slice %11 {offsets = [16, 384], sizes = [2, 128], strides = [1, 1]} : vector<18x512xf32> to vector<2x128xf32>
    %14 = math.tanh %13 : vector<2x128xf32>
    %c0_10 = arith.constant 0 : index
    %c0_11 = arith.constant 0 : index
    %15 = vector.load %arg6[%c0_10, %c0_11] : memref<1x384xf32, #tpu.memory_space<vmem>>, vector<1x384xf32>
    %16 = vector.extract_strided_slice %12 {offsets = [0, 0], sizes = [2, 384], strides = [1, 1]} : vector<16x384xf32> to vector<2x384xf32>
    %17 = arith.truncf %14 : vector<2x128xf32> to vector<2x128xbf16>
    %c0_12 = arith.constant 0 : index
    %c0_13 = arith.constant 0 : index
    %18 = vector.load %arg5[%c0_12, %c0_13] : memref<128x384xbf16, #tpu.memory_space<vmem>>, vector<128x384xbf16>
    %cst_14 = arith.constant dense<0.000000e+00> : vector<2x384xf32>
    %19 = tpu.matmul %17, %18, %cst_14 {dimension_numbers = #tpu.dot_dimension_numbers<[1], [0], [0], [1], [0, 0, 1, 1], [], []>} : vector<2x128xbf16>, vector<128x384xbf16>, vector<2x384xf32> -> vector<2x384xf32>
    %20 = vector.broadcast %15 : vector<1x384xf32> to vector<2x384xf32>
    %21 = arith.addf %19, %20 : vector<2x384xf32>
    %22 = vector.extract_strided_slice %16 {offsets = [0, 0], sizes = [2, 128], strides = [1, 1]} : vector<2x384xf32> to vector<2x128xf32>
    %23 = vector.extract_strided_slice %21 {offsets = [0, 0], sizes = [2, 128], strides = [1, 1]} : vector<2x384xf32> to vector<2x128xf32>
    %24 = arith.addf %22, %23 : vector<2x128xf32>
    %25 = arith.negf %24 : vector<2x128xf32>
    %26 = math.exp %25 : vector<2x128xf32>
    %cst_15 = arith.constant 1.000000e+00 : f32
    %27 = vector.broadcast %cst_15 : f32 to vector<2x128xf32>
    %28 = arith.addf %27, %26 : vector<2x128xf32>
    %29 = arith.divf %27, %28 : vector<2x128xf32>
    %30 = vector.extract_strided_slice %16 {offsets = [0, 128], sizes = [2, 128], strides = [1, 1]} : vector<2x384xf32> to vector<2x128xf32>
    %31 = vector.extract_strided_slice %21 {offsets = [0, 128], sizes = [2, 128], strides = [1, 1]} : vector<2x384xf32> to vector<2x128xf32>
    %32 = arith.addf %30, %31 : vector<2x128xf32>
    %33 = arith.negf %32 : vector<2x128xf32>
    %34 = math.exp %33 : vector<2x128xf32>
    %cst_16 = arith.constant 1.000000e+00 : f32
    %35 = vector.broadcast %cst_16 : f32 to vector<2x128xf32>
    %36 = arith.addf %35, %34 : vector<2x128xf32>
    %37 = arith.divf %35, %36 : vector<2x128xf32>
    %38 = vector.extract_strided_slice %16 {offsets = [0, 256], sizes = [2, 128], strides = [1, 1]} : vector<2x384xf32> to vector<2x128xf32>
    %39 = vector.extract_strided_slice %21 {offsets = [0, 256], sizes = [2, 128], strides = [1, 1]} : vector<2x384xf32> to vector<2x128xf32>
    %40 = arith.mulf %29, %39 : vector<2x128xf32>
    %41 = arith.addf %38, %40 : vector<2x128xf32>
    %42 = math.tanh %41 : vector<2x128xf32>
    %cst_17 = arith.constant 1.000000e+00 : f32
    %43 = vector.broadcast %cst_17 : f32 to vector<2x128xf32>
    %44 = arith.subf %43, %37 : vector<2x128xf32>
    %45 = arith.mulf %44, %42 : vector<2x128xf32>
    %46 = arith.mulf %37, %14 : vector<2x128xf32>
    %47 = arith.addf %45, %46 : vector<2x128xf32>
    %48 = vector.extract_strided_slice %12 {offsets = [2, 0], sizes = [2, 384], strides = [1, 1]} : vector<16x384xf32> to vector<2x384xf32>
    %49 = arith.truncf %47 : vector<2x128xf32> to vector<2x128xbf16>
    %c0_18 = arith.constant 0 : index
    %c0_19 = arith.constant 0 : index
    %50 = vector.load %arg5[%c0_18, %c0_19] : memref<128x384xbf16, #tpu.memory_space<vmem>>, vector<128x384xbf16>
    %cst_20 = arith.constant dense<0.000000e+00> : vector<2x384xf32>
    %51 = tpu.matmul %49, %50, %cst_20 {dimension_numbers = #tpu.dot_dimension_numbers<[1], [0], [0], [1], [0, 0, 1, 1], [], []>} : vector<2x128xbf16>, vector<128x384xbf16>, vector<2x384xf32> -> vector<2x384xf32>
    %52 = vector.broadcast %15 : vector<1x384xf32> to vector<2x384xf32>
    %53 = arith.addf %51, %52 : vector<2x384xf32>
    %54 = vector.extract_strided_slice %48 {offsets = [0, 0], sizes = [2, 128], strides = [1, 1]} : vector<2x384xf32> to vector<2x128xf32>
    %55 = vector.extract_strided_slice %53 {offsets = [0, 0], sizes = [2, 128], strides = [1, 1]} : vector<2x384xf32> to vector<2x128xf32>
    %56 = arith.addf %54, %55 : vector<2x128xf32>
    %57 = arith.negf %56 : vector<2x128xf32>
    %58 = math.exp %57 : vector<2x128xf32>
    %cst_21 = arith.constant 1.000000e+00 : f32
    %59 = vector.broadcast %cst_21 : f32 to vector<2x128xf32>
    %60 = arith.addf %59, %58 : vector<2x128xf32>
    %61 = arith.divf %59, %60 : vector<2x128xf32>
    %62 = vector.extract_strided_slice %48 {offsets = [0, 128], sizes = [2, 128], strides = [1, 1]} : vector<2x384xf32> to vector<2x128xf32>
    %63 = vector.extract_strided_slice %53 {offsets = [0, 128], sizes = [2, 128], strides = [1, 1]} : vector<2x384xf32> to vector<2x128xf32>
    %64 = arith.addf %62, %63 : vector<2x128xf32>
    %65 = arith.negf %64 : vector<2x128xf32>
    %66 = math.exp %65 : vector<2x128xf32>
    %cst_22 = arith.constant 1.000000e+00 : f32
    %67 = vector.broadcast %cst_22 : f32 to vector<2x128xf32>
    %68 = arith.addf %67, %66 : vector<2x128xf32>
    %69 = arith.divf %67, %68 : vector<2x128xf32>
    %70 = vector.extract_strided_slice %48 {offsets = [0, 256], sizes = [2, 128], strides = [1, 1]} : vector<2x384xf32> to vector<2x128xf32>
    %71 = vector.extract_strided_slice %53 {offsets = [0, 256], sizes = [2, 128], strides = [1, 1]} : vector<2x384xf32> to vector<2x128xf32>
    %72 = arith.mulf %61, %71 : vector<2x128xf32>
    %73 = arith.addf %70, %72 : vector<2x128xf32>
    %74 = math.tanh %73 : vector<2x128xf32>
    %cst_23 = arith.constant 1.000000e+00 : f32
    %75 = vector.broadcast %cst_23 : f32 to vector<2x128xf32>
    %76 = arith.subf %75, %69 : vector<2x128xf32>
    %77 = arith.mulf %76, %74 : vector<2x128xf32>
    %78 = arith.mulf %69, %47 : vector<2x128xf32>
    %79 = arith.addf %77, %78 : vector<2x128xf32>
    %80 = vector.extract_strided_slice %12 {offsets = [4, 0], sizes = [2, 384], strides = [1, 1]} : vector<16x384xf32> to vector<2x384xf32>
    %81 = arith.truncf %79 : vector<2x128xf32> to vector<2x128xbf16>
    %c0_24 = arith.constant 0 : index
    %c0_25 = arith.constant 0 : index
    %82 = vector.load %arg5[%c0_24, %c0_25] : memref<128x384xbf16, #tpu.memory_space<vmem>>, vector<128x384xbf16>
    %cst_26 = arith.constant dense<0.000000e+00> : vector<2x384xf32>
    %83 = tpu.matmul %81, %82, %cst_26 {dimension_numbers = #tpu.dot_dimension_numbers<[1], [0], [0], [1], [0, 0, 1, 1], [], []>} : vector<2x128xbf16>, vector<128x384xbf16>, vector<2x384xf32> -> vector<2x384xf32>
    %84 = vector.broadcast %15 : vector<1x384xf32> to vector<2x384xf32>
    %85 = arith.addf %83, %84 : vector<2x384xf32>
    %86 = vector.extract_strided_slice %80 {offsets = [0, 0], sizes = [2, 128], strides = [1, 1]} : vector<2x384xf32> to vector<2x128xf32>
    %87 = vector.extract_strided_slice %85 {offsets = [0, 0], sizes = [2, 128], strides = [1, 1]} : vector<2x384xf32> to vector<2x128xf32>
    %88 = arith.addf %86, %87 : vector<2x128xf32>
    %89 = arith.negf %88 : vector<2x128xf32>
    %90 = math.exp %89 : vector<2x128xf32>
    %cst_27 = arith.constant 1.000000e+00 : f32
    %91 = vector.broadcast %cst_27 : f32 to vector<2x128xf32>
    %92 = arith.addf %91, %90 : vector<2x128xf32>
    %93 = arith.divf %91, %92 : vector<2x128xf32>
    %94 = vector.extract_strided_slice %80 {offsets = [0, 128], sizes = [2, 128], strides = [1, 1]} : vector<2x384xf32> to vector<2x128xf32>
    %95 = vector.extract_strided_slice %85 {offsets = [0, 128], sizes = [2, 128], strides = [1, 1]} : vector<2x384xf32> to vector<2x128xf32>
    %96 = arith.addf %94, %95 : vector<2x128xf32>
    %97 = arith.negf %96 : vector<2x128xf32>
    %98 = math.exp %97 : vector<2x128xf32>
    %cst_28 = arith.constant 1.000000e+00 : f32
    %99 = vector.broadcast %cst_28 : f32 to vector<2x128xf32>
    %100 = arith.addf %99, %98 : vector<2x128xf32>
    %101 = arith.divf %99, %100 : vector<2x128xf32>
    %102 = vector.extract_strided_slice %80 {offsets = [0, 256], sizes = [2, 128], strides = [1, 1]} : vector<2x384xf32> to vector<2x128xf32>
    %103 = vector.extract_strided_slice %85 {offsets = [0, 256], sizes = [2, 128], strides = [1, 1]} : vector<2x384xf32> to vector<2x128xf32>
    %104 = arith.mulf %93, %103 : vector<2x128xf32>
    %105 = arith.addf %102, %104 : vector<2x128xf32>
    %106 = math.tanh %105 : vector<2x128xf32>
    %cst_29 = arith.constant 1.000000e+00 : f32
    %107 = vector.broadcast %cst_29 : f32 to vector<2x128xf32>
    %108 = arith.subf %107, %101 : vector<2x128xf32>
    %109 = arith.mulf %108, %106 : vector<2x128xf32>
    %110 = arith.mulf %101, %79 : vector<2x128xf32>
    %111 = arith.addf %109, %110 : vector<2x128xf32>
    %112 = vector.extract_strided_slice %12 {offsets = [6, 0], sizes = [2, 384], strides = [1, 1]} : vector<16x384xf32> to vector<2x384xf32>
    %113 = arith.truncf %111 : vector<2x128xf32> to vector<2x128xbf16>
    %c0_30 = arith.constant 0 : index
    %c0_31 = arith.constant 0 : index
    %114 = vector.load %arg5[%c0_30, %c0_31] : memref<128x384xbf16, #tpu.memory_space<vmem>>, vector<128x384xbf16>
    %cst_32 = arith.constant dense<0.000000e+00> : vector<2x384xf32>
    %115 = tpu.matmul %113, %114, %cst_32 {dimension_numbers = #tpu.dot_dimension_numbers<[1], [0], [0], [1], [0, 0, 1, 1], [], []>} : vector<2x128xbf16>, vector<128x384xbf16>, vector<2x384xf32> -> vector<2x384xf32>
    %116 = vector.broadcast %15 : vector<1x384xf32> to vector<2x384xf32>
    %117 = arith.addf %115, %116 : vector<2x384xf32>
    %118 = vector.extract_strided_slice %112 {offsets = [0, 0], sizes = [2, 128], strides = [1, 1]} : vector<2x384xf32> to vector<2x128xf32>
    %119 = vector.extract_strided_slice %117 {offsets = [0, 0], sizes = [2, 128], strides = [1, 1]} : vector<2x384xf32> to vector<2x128xf32>
    %120 = arith.addf %118, %119 : vector<2x128xf32>
    %121 = arith.negf %120 : vector<2x128xf32>
    %122 = math.exp %121 : vector<2x128xf32>
    %cst_33 = arith.constant 1.000000e+00 : f32
    %123 = vector.broadcast %cst_33 : f32 to vector<2x128xf32>
    %124 = arith.addf %123, %122 : vector<2x128xf32>
    %125 = arith.divf %123, %124 : vector<2x128xf32>
    %126 = vector.extract_strided_slice %112 {offsets = [0, 128], sizes = [2, 128], strides = [1, 1]} : vector<2x384xf32> to vector<2x128xf32>
    %127 = vector.extract_strided_slice %117 {offsets = [0, 128], sizes = [2, 128], strides = [1, 1]} : vector<2x384xf32> to vector<2x128xf32>
    %128 = arith.addf %126, %127 : vector<2x128xf32>
    %129 = arith.negf %128 : vector<2x128xf32>
    %130 = math.exp %129 : vector<2x128xf32>
    %cst_34 = arith.constant 1.000000e+00 : f32
    %131 = vector.broadcast %cst_34 : f32 to vector<2x128xf32>
    %132 = arith.addf %131, %130 : vector<2x128xf32>
    %133 = arith.divf %131, %132 : vector<2x128xf32>
    %134 = vector.extract_strided_slice %112 {offsets = [0, 256], sizes = [2, 128], strides = [1, 1]} : vector<2x384xf32> to vector<2x128xf32>
    %135 = vector.extract_strided_slice %117 {offsets = [0, 256], sizes = [2, 128], strides = [1, 1]} : vector<2x384xf32> to vector<2x128xf32>
    %136 = arith.mulf %125, %135 : vector<2x128xf32>
    %137 = arith.addf %134, %136 : vector<2x128xf32>
    %138 = math.tanh %137 : vector<2x128xf32>
    %cst_35 = arith.constant 1.000000e+00 : f32
    %139 = vector.broadcast %cst_35 : f32 to vector<2x128xf32>
    %140 = arith.subf %139, %133 : vector<2x128xf32>
    %141 = arith.mulf %140, %138 : vector<2x128xf32>
    %142 = arith.mulf %133, %111 : vector<2x128xf32>
    %143 = arith.addf %141, %142 : vector<2x128xf32>
    %144 = vector.extract_strided_slice %12 {offsets = [8, 0], sizes = [2, 384], strides = [1, 1]} : vector<16x384xf32> to vector<2x384xf32>
    %145 = arith.truncf %143 : vector<2x128xf32> to vector<2x128xbf16>
    %c0_36 = arith.constant 0 : index
    %c0_37 = arith.constant 0 : index
    %146 = vector.load %arg5[%c0_36, %c0_37] : memref<128x384xbf16, #tpu.memory_space<vmem>>, vector<128x384xbf16>
    %cst_38 = arith.constant dense<0.000000e+00> : vector<2x384xf32>
    %147 = tpu.matmul %145, %146, %cst_38 {dimension_numbers = #tpu.dot_dimension_numbers<[1], [0], [0], [1], [0, 0, 1, 1], [], []>} : vector<2x128xbf16>, vector<128x384xbf16>, vector<2x384xf32> -> vector<2x384xf32>
    %148 = vector.broadcast %15 : vector<1x384xf32> to vector<2x384xf32>
    %149 = arith.addf %147, %148 : vector<2x384xf32>
    %150 = vector.extract_strided_slice %144 {offsets = [0, 0], sizes = [2, 128], strides = [1, 1]} : vector<2x384xf32> to vector<2x128xf32>
    %151 = vector.extract_strided_slice %149 {offsets = [0, 0], sizes = [2, 128], strides = [1, 1]} : vector<2x384xf32> to vector<2x128xf32>
    %152 = arith.addf %150, %151 : vector<2x128xf32>
    %153 = arith.negf %152 : vector<2x128xf32>
    %154 = math.exp %153 : vector<2x128xf32>
    %cst_39 = arith.constant 1.000000e+00 : f32
    %155 = vector.broadcast %cst_39 : f32 to vector<2x128xf32>
    %156 = arith.addf %155, %154 : vector<2x128xf32>
    %157 = arith.divf %155, %156 : vector<2x128xf32>
    %158 = vector.extract_strided_slice %144 {offsets = [0, 128], sizes = [2, 128], strides = [1, 1]} : vector<2x384xf32> to vector<2x128xf32>
    %159 = vector.extract_strided_slice %149 {offsets = [0, 128], sizes = [2, 128], strides = [1, 1]} : vector<2x384xf32> to vector<2x128xf32>
    %160 = arith.addf %158, %159 : vector<2x128xf32>
    %161 = arith.negf %160 : vector<2x128xf32>
    %162 = math.exp %161 : vector<2x128xf32>
    %cst_40 = arith.constant 1.000000e+00 : f32
    %163 = vector.broadcast %cst_40 : f32 to vector<2x128xf32>
    %164 = arith.addf %163, %162 : vector<2x128xf32>
    %165 = arith.divf %163, %164 : vector<2x128xf32>
    %166 = vector.extract_strided_slice %144 {offsets = [0, 256], sizes = [2, 128], strides = [1, 1]} : vector<2x384xf32> to vector<2x128xf32>
    %167 = vector.extract_strided_slice %149 {offsets = [0, 256], sizes = [2, 128], strides = [1, 1]} : vector<2x384xf32> to vector<2x128xf32>
    %168 = arith.mulf %157, %167 : vector<2x128xf32>
    %169 = arith.addf %166, %168 : vector<2x128xf32>
    %170 = math.tanh %169 : vector<2x128xf32>
    %cst_41 = arith.constant 1.000000e+00 : f32
    %171 = vector.broadcast %cst_41 : f32 to vector<2x128xf32>
    %172 = arith.subf %171, %165 : vector<2x128xf32>
    %173 = arith.mulf %172, %170 : vector<2x128xf32>
    %174 = arith.mulf %165, %143 : vector<2x128xf32>
    %175 = arith.addf %173, %174 : vector<2x128xf32>
    %176 = vector.extract_strided_slice %12 {offsets = [10, 0], sizes = [2, 384], strides = [1, 1]} : vector<16x384xf32> to vector<2x384xf32>
    %177 = arith.truncf %175 : vector<2x128xf32> to vector<2x128xbf16>
    %c0_42 = arith.constant 0 : index
    %c0_43 = arith.constant 0 : index
    %178 = vector.load %arg5[%c0_42, %c0_43] : memref<128x384xbf16, #tpu.memory_space<vmem>>, vector<128x384xbf16>
    %cst_44 = arith.constant dense<0.000000e+00> : vector<2x384xf32>
    %179 = tpu.matmul %177, %178, %cst_44 {dimension_numbers = #tpu.dot_dimension_numbers<[1], [0], [0], [1], [0, 0, 1, 1], [], []>} : vector<2x128xbf16>, vector<128x384xbf16>, vector<2x384xf32> -> vector<2x384xf32>
    %180 = vector.broadcast %15 : vector<1x384xf32> to vector<2x384xf32>
    %181 = arith.addf %179, %180 : vector<2x384xf32>
    %182 = vector.extract_strided_slice %176 {offsets = [0, 0], sizes = [2, 128], strides = [1, 1]} : vector<2x384xf32> to vector<2x128xf32>
    %183 = vector.extract_strided_slice %181 {offsets = [0, 0], sizes = [2, 128], strides = [1, 1]} : vector<2x384xf32> to vector<2x128xf32>
    %184 = arith.addf %182, %183 : vector<2x128xf32>
    %185 = arith.negf %184 : vector<2x128xf32>
    %186 = math.exp %185 : vector<2x128xf32>
    %cst_45 = arith.constant 1.000000e+00 : f32
    %187 = vector.broadcast %cst_45 : f32 to vector<2x128xf32>
    %188 = arith.addf %187, %186 : vector<2x128xf32>
    %189 = arith.divf %187, %188 : vector<2x128xf32>
    %190 = vector.extract_strided_slice %176 {offsets = [0, 128], sizes = [2, 128], strides = [1, 1]} : vector<2x384xf32> to vector<2x128xf32>
    %191 = vector.extract_strided_slice %181 {offsets = [0, 128], sizes = [2, 128], strides = [1, 1]} : vector<2x384xf32> to vector<2x128xf32>
    %192 = arith.addf %190, %191 : vector<2x128xf32>
    %193 = arith.negf %192 : vector<2x128xf32>
    %194 = math.exp %193 : vector<2x128xf32>
    %cst_46 = arith.constant 1.000000e+00 : f32
    %195 = vector.broadcast %cst_46 : f32 to vector<2x128xf32>
    %196 = arith.addf %195, %194 : vector<2x128xf32>
    %197 = arith.divf %195, %196 : vector<2x128xf32>
    %198 = vector.extract_strided_slice %176 {offsets = [0, 256], sizes = [2, 128], strides = [1, 1]} : vector<2x384xf32> to vector<2x128xf32>
    %199 = vector.extract_strided_slice %181 {offsets = [0, 256], sizes = [2, 128], strides = [1, 1]} : vector<2x384xf32> to vector<2x128xf32>
    %200 = arith.mulf %189, %199 : vector<2x128xf32>
    %201 = arith.addf %198, %200 : vector<2x128xf32>
    %202 = math.tanh %201 : vector<2x128xf32>
    %cst_47 = arith.constant 1.000000e+00 : f32
    %203 = vector.broadcast %cst_47 : f32 to vector<2x128xf32>
    %204 = arith.subf %203, %197 : vector<2x128xf32>
    %205 = arith.mulf %204, %202 : vector<2x128xf32>
    %206 = arith.mulf %197, %175 : vector<2x128xf32>
    %207 = arith.addf %205, %206 : vector<2x128xf32>
    %208 = vector.extract_strided_slice %12 {offsets = [12, 0], sizes = [2, 384], strides = [1, 1]} : vector<16x384xf32> to vector<2x384xf32>
    %209 = arith.truncf %207 : vector<2x128xf32> to vector<2x128xbf16>
    %c0_48 = arith.constant 0 : index
    %c0_49 = arith.constant 0 : index
    %210 = vector.load %arg5[%c0_48, %c0_49] : memref<128x384xbf16, #tpu.memory_space<vmem>>, vector<128x384xbf16>
    %cst_50 = arith.constant dense<0.000000e+00> : vector<2x384xf32>
    %211 = tpu.matmul %209, %210, %cst_50 {dimension_numbers = #tpu.dot_dimension_numbers<[1], [0], [0], [1], [0, 0, 1, 1], [], []>} : vector<2x128xbf16>, vector<128x384xbf16>, vector<2x384xf32> -> vector<2x384xf32>
    %212 = vector.broadcast %15 : vector<1x384xf32> to vector<2x384xf32>
    %213 = arith.addf %211, %212 : vector<2x384xf32>
    %214 = vector.extract_strided_slice %208 {offsets = [0, 0], sizes = [2, 128], strides = [1, 1]} : vector<2x384xf32> to vector<2x128xf32>
    %215 = vector.extract_strided_slice %213 {offsets = [0, 0], sizes = [2, 128], strides = [1, 1]} : vector<2x384xf32> to vector<2x128xf32>
    %216 = arith.addf %214, %215 : vector<2x128xf32>
    %217 = arith.negf %216 : vector<2x128xf32>
    %218 = math.exp %217 : vector<2x128xf32>
    %cst_51 = arith.constant 1.000000e+00 : f32
    %219 = vector.broadcast %cst_51 : f32 to vector<2x128xf32>
    %220 = arith.addf %219, %218 : vector<2x128xf32>
    %221 = arith.divf %219, %220 : vector<2x128xf32>
    %222 = vector.extract_strided_slice %208 {offsets = [0, 128], sizes = [2, 128], strides = [1, 1]} : vector<2x384xf32> to vector<2x128xf32>
    %223 = vector.extract_strided_slice %213 {offsets = [0, 128], sizes = [2, 128], strides = [1, 1]} : vector<2x384xf32> to vector<2x128xf32>
    %224 = arith.addf %222, %223 : vector<2x128xf32>
    %225 = arith.negf %224 : vector<2x128xf32>
    %226 = math.exp %225 : vector<2x128xf32>
    %cst_52 = arith.constant 1.000000e+00 : f32
    %227 = vector.broadcast %cst_52 : f32 to vector<2x128xf32>
    %228 = arith.addf %227, %226 : vector<2x128xf32>
    %229 = arith.divf %227, %228 : vector<2x128xf32>
    %230 = vector.extract_strided_slice %208 {offsets = [0, 256], sizes = [2, 128], strides = [1, 1]} : vector<2x384xf32> to vector<2x128xf32>
    %231 = vector.extract_strided_slice %213 {offsets = [0, 256], sizes = [2, 128], strides = [1, 1]} : vector<2x384xf32> to vector<2x128xf32>
    %232 = arith.mulf %221, %231 : vector<2x128xf32>
    %233 = arith.addf %230, %232 : vector<2x128xf32>
    %234 = math.tanh %233 : vector<2x128xf32>
    %cst_53 = arith.constant 1.000000e+00 : f32
    %235 = vector.broadcast %cst_53 : f32 to vector<2x128xf32>
    %236 = arith.subf %235, %229 : vector<2x128xf32>
    %237 = arith.mulf %236, %234 : vector<2x128xf32>
    %238 = arith.mulf %229, %207 : vector<2x128xf32>
    %239 = arith.addf %237, %238 : vector<2x128xf32>
    %240 = vector.extract_strided_slice %12 {offsets = [14, 0], sizes = [2, 384], strides = [1, 1]} : vector<16x384xf32> to vector<2x384xf32>
    %241 = arith.truncf %239 : vector<2x128xf32> to vector<2x128xbf16>
    %c0_54 = arith.constant 0 : index
    %c0_55 = arith.constant 0 : index
    %242 = vector.load %arg5[%c0_54, %c0_55] : memref<128x384xbf16, #tpu.memory_space<vmem>>, vector<128x384xbf16>
    %cst_56 = arith.constant dense<0.000000e+00> : vector<2x384xf32>
    %243 = tpu.matmul %241, %242, %cst_56 {dimension_numbers = #tpu.dot_dimension_numbers<[1], [0], [0], [1], [0, 0, 1, 1], [], []>} : vector<2x128xbf16>, vector<128x384xbf16>, vector<2x384xf32> -> vector<2x384xf32>
    %244 = vector.broadcast %15 : vector<1x384xf32> to vector<2x384xf32>
    %245 = arith.addf %243, %244 : vector<2x384xf32>
    %246 = vector.extract_strided_slice %240 {offsets = [0, 0], sizes = [2, 128], strides = [1, 1]} : vector<2x384xf32> to vector<2x128xf32>
    %247 = vector.extract_strided_slice %245 {offsets = [0, 0], sizes = [2, 128], strides = [1, 1]} : vector<2x384xf32> to vector<2x128xf32>
    %248 = arith.addf %246, %247 : vector<2x128xf32>
    %249 = arith.negf %248 : vector<2x128xf32>
    %250 = math.exp %249 : vector<2x128xf32>
    %cst_57 = arith.constant 1.000000e+00 : f32
    %251 = vector.broadcast %cst_57 : f32 to vector<2x128xf32>
    %252 = arith.addf %251, %250 : vector<2x128xf32>
    %253 = arith.divf %251, %252 : vector<2x128xf32>
    %254 = vector.extract_strided_slice %240 {offsets = [0, 128], sizes = [2, 128], strides = [1, 1]} : vector<2x384xf32> to vector<2x128xf32>
    %255 = vector.extract_strided_slice %245 {offsets = [0, 128], sizes = [2, 128], strides = [1, 1]} : vector<2x384xf32> to vector<2x128xf32>
    %256 = arith.addf %254, %255 : vector<2x128xf32>
    %257 = arith.negf %256 : vector<2x128xf32>
    %258 = math.exp %257 : vector<2x128xf32>
    %cst_58 = arith.constant 1.000000e+00 : f32
    %259 = vector.broadcast %cst_58 : f32 to vector<2x128xf32>
    %260 = arith.addf %259, %258 : vector<2x128xf32>
    %261 = arith.divf %259, %260 : vector<2x128xf32>
    %262 = vector.extract_strided_slice %240 {offsets = [0, 256], sizes = [2, 128], strides = [1, 1]} : vector<2x384xf32> to vector<2x128xf32>
    %263 = vector.extract_strided_slice %245 {offsets = [0, 256], sizes = [2, 128], strides = [1, 1]} : vector<2x384xf32> to vector<2x128xf32>
    %264 = arith.mulf %253, %263 : vector<2x128xf32>
    %265 = arith.addf %262, %264 : vector<2x128xf32>
    %266 = math.tanh %265 : vector<2x128xf32>
    %cst_59 = arith.constant 1.000000e+00 : f32
    %267 = vector.broadcast %cst_59 : f32 to vector<2x128xf32>
    %268 = arith.subf %267, %261 : vector<2x128xf32>
    %269 = arith.mulf %268, %266 : vector<2x128xf32>
    %270 = arith.mulf %261, %239 : vector<2x128xf32>
    %271 = arith.addf %269, %270 : vector<2x128xf32>
    %272 = tpu.concatenate %47, %79, %111, %143, %175, %207, %239, %271 in 0 : vector<2x128xf32>, vector<2x128xf32>, vector<2x128xf32>, vector<2x128xf32>, vector<2x128xf32>, vector<2x128xf32>, vector<2x128xf32>, vector<2x128xf32> -> vector<16x128xf32>
    %c0_60 = arith.constant 0 : index
    %c0_61 = arith.constant 0 : index
    %273 = vector.load %arg9[%c0_60, %c0_61] : memref<16x128xf32, #tpu.memory_space<vmem>>, vector<16x128xf32>
    tpu.vector_store %arg9[%c0_60, %c0_61], %272 {strides = array<i32>} : memref<16x128xf32, #tpu.memory_space<vmem>>, vector<16x128xf32>,
    %274 = arith.truncf %271 : vector<2x128xf32> to vector<2x128xbf16>
    %c0_62 = arith.constant 0 : index
    %c0_63 = arith.constant 0 : index
    %275 = vector.load %arg7[%c0_62, %c0_63] : memref<128x128xbf16, #tpu.memory_space<vmem>>, vector<128x128xbf16>
    %cst_64 = arith.constant dense<0.000000e+00> : vector<2x128xf32>
    %276 = tpu.matmul %274, %275, %cst_64 {dimension_numbers = #tpu.dot_dimension_numbers<[1], [0], [0], [1], [0, 0, 1, 1], [], []>} : vector<2x128xbf16>, vector<128x128xbf16>, vector<2x128xf32> -> vector<2x128xf32>
    %c0_65 = arith.constant 0 : index
    %c0_66 = arith.constant 0 : index
    %277 = vector.load %arg8[%c0_65, %c0_66] : memref<1x128xf32, #tpu.memory_space<vmem>>, vector<1x128xf32>
    %278 = vector.broadcast %277 : vector<1x128xf32> to vector<2x128xf32>
    %279 = arith.addf %276, %278 : vector<2x128xf32>
    %c0_67 = arith.constant 0 : index
    %c0_68 = arith.constant 0 : index
    %280 = vector.load %arg10[%c0_67, %c0_68] : memref<2x128xf32, #tpu.memory_space<vmem>>, vector<2x128xf32>
    tpu.vector_store %arg10[%c0_67, %c0_68], %279 {strides = array<i32>} : memref<2x128xf32, #tpu.memory_space<vmem>>, vector<2x128xf32>,
    return
  }
}

</mosaic_0001>

<llo_original>
// kernel: tpu_custom_call.1
$region0: #{tpu_custom_call.1}
  #allocation0 [shape = 'u32[]', space=smem, size = 0x4, offset = 0x4, fixed_abs, tag = 'smem constant byte address 0x4 - core index']
  #allocation1 [shape = 'u32[72,128]{1,0:T(1,128)}', space=vmem, size = 0x9000, scoped, tag = 'internal scratch']
  %s0 = inlined_call_operand.vmem [shape: bf16[18,1000], index: 0, kind: input, shape index: {}]
  %s1 = inlined_call_operand.vmem [shape: bf16[1000,32], index: 1, kind: input, shape index: {}]
  %s2 = inlined_call_operand.vmem [shape: f32[1,32], index: 2, kind: input, shape index: {}]
  %s3 = inlined_call_operand.vmem [shape: bf16[32,512], index: 3, kind: input, shape index: {}]
  %s4 = inlined_call_operand.vmem [shape: f32[1,512], index: 4, kind: input, shape index: {}]
  %s5 = inlined_call_operand.vmem [shape: bf16[128,384], index: 5, kind: input, shape index: {}]
  %s6 = inlined_call_operand.vmem [shape: f32[1,384], index: 6, kind: input, shape index: {}]
  %s7 = inlined_call_operand.vmem [shape: bf16[128,128], index: 7, kind: input, shape index: {}]
  %s8 = inlined_call_operand.vmem [shape: f32[1,128], index: 8, kind: input, shape index: {}]
  %s9 = inlined_call_operand.hbm [shape: f32[16,128], index: 9, kind: output, shape index: {0}]
  %s10 = inlined_call_operand.hbm [shape: f32[2,128], index: 10, kind: output, shape index: {1}]
  %11 = xla_tuple %s9, %s10
  %s12 = sld [smem:[#allocation0]]
  $region54: #{tpu_custom_call.1} parent=0
    _
  %s14 = ssub.s32 1, %s12
  %s15 = scalar_select 0, %s14, %s12
  $region1: #{tpu_custom_call.1} parent=0
    #allocation2 [shape = 'u8[8192]{0}', space=vmem, size = 0x2000, scoped, tag = 'output window, operand 0, single buffered']
    #allocation3 [shape = 's32[1]{0}', space=sflag, size = 0x4, scoped, tag = 'scoped memory for tpu_custom_call.1']
    #allocation4 [shape = 'u8[1024]{0}', space=vmem, size = 0x400, scoped, tag = 'output window, operand 1, single buffered']
    #allocation5 [shape = 's32[1]{0}', space=sflag, size = 0x4, scoped, tag = 'scoped memory for tpu_custom_call.1']
    %16 = vsyncpa [#allocation3], 0
    %17 = vsyncpa [#allocation5], 0
    // Predicated region
    $region2: #{tpu_custom_call.1} parent=1 // pred_check
      _
    $region3: #{tpu_custom_call.1} parent=1 // pred_check_branch
      %19 = sbr.rel (0) target = $region5
    $region4: #{tpu_custom_call.1} parent=1 // pred_region
      _
    $region5: #{tpu_custom_call.1} parent=1 // pred_fallthru
      _
    // Predicated region
    $region6: #{tpu_custom_call.1} parent=1 // pred_check
      _
    $region7: #{tpu_custom_call.1} parent=1 // pred_check_branch
      %21 = sbr.rel (0) target = $region9
    $region8: #{tpu_custom_call.1} parent=1 // pred_region
      _
    $region9: #{tpu_custom_call.1} parent=1 // pred_fallthru
      _
    // Predicated region
    $region10: #{tpu_custom_call.1} parent=1 // pred_check
      _
    $region11: #{tpu_custom_call.1} parent=1 // pred_check_branch
      %23 = sbr.rel (0) target = $region13
    $region12: #{tpu_custom_call.1} parent=1 // pred_region
      _
    $region13: #{tpu_custom_call.1} parent=1 // pred_fallthru
      _
    // Predicated region
    $region14: #{tpu_custom_call.1} parent=1 // pred_check
      _
    $region15: #{tpu_custom_call.1} parent=1 // pred_check_branch
      %25 = sbr.rel (0) target = $region17
    $region16: #{tpu_custom_call.1} parent=1 // pred_region
      _
    $region17: #{tpu_custom_call.1} parent=1 // pred_fallthru
      _
    // Predicated region
    $region18: #{tpu_custom_call.1} parent=1 // pred_check
      _
    $region19: #{tpu_custom_call.1} parent=1 // pred_check_branch
      %27 = sbr.rel (0) target = $region21
    $region20: #{tpu_custom_call.1} parent=1 // pred_region
      _
    $region21: #{tpu_custom_call.1} parent=1 // pred_fallthru
      _
    // Predicated region
    $region22: #{tpu_custom_call.1} parent=1 // pred_check
      _
    $region23: #{tpu_custom_call.1} parent=1 // pred_check_branch
      %29 = sbr.rel (0) target = $region25
    $region24: #{tpu_custom_call.1} parent=1 // pred_region
      _
    $region25: #{tpu_custom_call.1} parent=1 // pred_fallthru
      _
    // Predicated region
    $region26: #{tpu_custom_call.1} parent=1 // pred_check
      _
    $region27: #{tpu_custom_call.1} parent=1 // pred_check_branch
      %31 = sbr.rel (0) target = $region29
    $region28: #{tpu_custom_call.1} parent=1 // pred_region
      _
    $region29: #{tpu_custom_call.1} parent=1 // pred_fallthru
      _
    // Predicated region
    $region30: #{tpu_custom_call.1} parent=1 // pred_check
      _
    $region31: #{tpu_custom_call.1} parent=1 // pred_check_branch
      %33 = sbr.rel (0) target = $region33
    $region32: #{tpu_custom_call.1} parent=1 // pred_region
      _
    $region33: #{tpu_custom_call.1} parent=1 // pred_fallthru
      _
    // Predicated region
    $region34: #{tpu_custom_call.1} parent=1 // pred_check
      _
    $region35: #{tpu_custom_call.1} parent=1 // pred_check_branch
      %35 = sbr.rel (0) target = $region37
    $region36: #{tpu_custom_call.1} parent=1 // pred_region
      _
    $region37: #{tpu_custom_call.1} parent=1 // pred_fallthru
      _
    %v37 = vld [vmem:[%s0] sm:$0xff]
    %v38 = vld [vmem:[%s0 + $0x8] sm:$0xff]
    %v39 = vld [vmem:[%s0 + $0x10] sm:$0xff]
    %v40 = vld [vmem:[%s0 + $0x18] sm:$0xff]
    %v41 = vld [vmem:[%s0 + $0x20] sm:$0xff]
    %v42 = vld [vmem:[%s0 + $0x28] sm:$0xff]
    %v43 = vld [vmem:[%s0 + $0x30] sm:$0xff]
    %v44 = vld [vmem:[%s0 + $0x38] sm:$0xff]
    %v45 = vld [vmem:[%s0 + $0x40] sm:$0x11]
    %v46 = vld [vmem:[%s0 + $0x48] sm:$0x11]
    %v47 = vld [vmem:[%s0 + $0x50] sm:$0x11]
    %v48 = vld [vmem:[%s0 + $0x58] sm:$0x11]
    %v49 = vld [vmem:[%s1] sm:$0xf]
    %v50 = vld [vmem:[%s1 + $0x4] sm:$0xf]
    %v51 = vld [vmem:[%s1 + $0x8] sm:$0xf]
    %v52 = vld [vmem:[%s1 + $0xc] sm:$0xf]
    %v53 = vld [vmem:[%s1 + $0x10] sm:$0xf]
    %v54 = vld [vmem:[%s1 + $0x14] sm:$0xf]
    %v55 = vld [vmem:[%s1 + $0x18] sm:$0xf]
    %v56 = vld [vmem:[%s1 + $0x1c] sm:$0xf]
    %v57 = vld [vmem:[%s1 + $0x20] sm:$0xf]
    %v58 = vld [vmem:[%s1 + $0x24] sm:$0xf]
    %v59 = vld [vmem:[%s1 + $0x28] sm:$0xf]
    %v60 = vld [vmem:[%s1 + $0x2c] sm:$0xf]
    %v61 = vld [vmem:[%s1 + $0x30] sm:$0xf]
    %v62 = vld [vmem:[%s1 + $0x34] sm:$0xf]
    %v63 = vld [vmem:[%s1 + $0x38] sm:$0xf]
    %v64 = vld [vmem:[%s1 + $0x3c] sm:$0xf]
    %v65 = vld [vmem:[%s1 + $0x40] sm:$0xf]
    %v66 = vld [vmem:[%s1 + $0x44] sm:$0xf]
    %v67 = vld [vmem:[%s1 + $0x48] sm:$0xf]
    %v68 = vld [vmem:[%s1 + $0x4c] sm:$0xf]
    %v69 = vld [vmem:[%s1 + $0x50] sm:$0xf]
    %v70 = vld [vmem:[%s1 + $0x54] sm:$0xf]
    %v71 = vld [vmem:[%s1 + $0x58] sm:$0xf]
    %v72 = vld [vmem:[%s1 + $0x5c] sm:$0xf]
    %v73 = vld [vmem:[%s1 + $0x60] sm:$0xf]
    %v74 = vld [vmem:[%s1 + $0x64] sm:$0xf]
    %v75 = vld [vmem:[%s1 + $0x68] sm:$0xf]
    %v76 = vld [vmem:[%s1 + $0x6c] sm:$0xf]
    %v77 = vld [vmem:[%s1 + $0x70] sm:$0xf]
    %v78 = vld [vmem:[%s1 + $0x74] sm:$0xf]
    %v79 = vld [vmem:[%s1 + $0x78] sm:$0xf]
    %v80 = vld [vmem:[%s1 + $0x7c] sm:$0xf]
    %v81 = vld [vmem:[%s1 + $0x80] sm:$0xf]
    %v82 = vld [vmem:[%s1 + $0x84] sm:$0xf]
    %v83 = vld [vmem:[%s1 + $0x88] sm:$0xf]
    %v84 = vld [vmem:[%s1 + $0x8c] sm:$0xf]
    %v85 = vld [vmem:[%s1 + $0x90] sm:$0xf]
    %v86 = vld [vmem:[%s1 + $0x94] sm:$0xf]
    %v87 = vld [vmem:[%s1 + $0x98] sm:$0xf]
    %v88 = vld [vmem:[%s1 + $0x9c] sm:$0xf]
    %v89 = vld [vmem:[%s1 + $0xa0] sm:$0xf]
    %v90 = vld [vmem:[%s1 + $0xa4] sm:$0xf]
    %v91 = vld [vmem:[%s1 + $0xa8] sm:$0xf]
    %v92 = vld [vmem:[%s1 + $0xac] sm:$0xf]
    %v93 = vld [vmem:[%s1 + $0xb0] sm:$0xf]
    %v94 = vld [vmem:[%s1 + $0xb4] sm:$0xf]
    %v95 = vld [vmem:[%s1 + $0xb8] sm:$0xf]
    %v96 = vld [vmem:[%s1 + $0xbc] sm:$0xf]
    %v97 = vld [vmem:[%s1 + $0xc0] sm:$0xf]
    %v98 = vld [vmem:[%s1 + $0xc4] sm:$0xf]
    %v99 = vld [vmem:[%s1 + $0xc8] sm:$0xf]
    %v100 = vld [vmem:[%s1 + $0xcc] sm:$0xf]
    %v101 = vld [vmem:[%s1 + $0xd0] sm:$0xf]
    %v102 = vld [vmem:[%s1 + $0xd4] sm:$0xf]
    %v103 = vld [vmem:[%s1 + $0xd8] sm:$0xf]
    %v104 = vld [vmem:[%s1 + $0xdc] sm:$0xf]
    %v105 = vld [vmem:[%s1 + $0xe0] sm:$0xf]
    %v106 = vld [vmem:[%s1 + $0xe4] sm:$0xf]
    %v107 = vld [vmem:[%s1 + $0xe8] sm:$0xf]
    %v108 = vld [vmem:[%s1 + $0xec] sm:$0xf]
    %v109 = vld [vmem:[%s1 + $0xf0] sm:$0xf]
    %v110 = vld [vmem:[%s1 + $0xf4] sm:$0xf]
    %v111 = vld [vmem:[%s1 + $0xf8] sm:$0xf]
    %v112 = vld [vmem:[%s1 + $0xfc] sm:$0xf]
    %v113 = vld [vmem:[%s1 + $0x100] sm:$0xf]
    %v114 = vld [vmem:[%s1 + $0x104] sm:$0xf]
    %v115 = vld [vmem:[%s1 + $0x108] sm:$0xf]
    %v116 = vld [vmem:[%s1 + $0x10c] sm:$0xf]
    %v117 = vld [vmem:[%s1 + $0x110] sm:$0xf]
    %v118 = vld [vmem:[%s1 + $0x114] sm:$0xf]
    %v119 = vld [vmem:[%s1 + $0x118] sm:$0xf]
    %v120 = vld [vmem:[%s1 + $0x11c] sm:$0xf]
    %v121 = vld [vmem:[%s1 + $0x120] sm:$0xf]
    %v122 = vld [vmem:[%s1 + $0x124] sm:$0xf]
    %v123 = vld [vmem:[%s1 + $0x128] sm:$0xf]
    %v124 = vld [vmem:[%s1 + $0x12c] sm:$0xf]
    %v125 = vld [vmem:[%s1 + $0x130] sm:$0xf]
    %v126 = vld [vmem:[%s1 + $0x134] sm:$0xf]
    %v127 = vld [vmem:[%s1 + $0x138] sm:$0xf]
    %v128 = vld [vmem:[%s1 + $0x13c] sm:$0xf]
    %v129 = vld [vmem:[%s1 + $0x140] sm:$0xf]
    %v130 = vld [vmem:[%s1 + $0x144] sm:$0xf]
    %v131 = vld [vmem:[%s1 + $0x148] sm:$0xf]
    %v132 = vld [vmem:[%s1 + $0x14c] sm:$0xf]
    %v133 = vld [vmem:[%s1 + $0x150] sm:$0xf]
    %v134 = vld [vmem:[%s1 + $0x154] sm:$0xf]
    %v135 = vld [vmem:[%s1 + $0x158] sm:$0xf]
    %v136 = vld [vmem:[%s1 + $0x15c] sm:$0xf]
    %v137 = vld [vmem:[%s1 + $0x160] sm:$0xf]
    %v138 = vld [vmem:[%s1 + $0x164] sm:$0xf]
    %v139 = vld [vmem:[%s1 + $0x168] sm:$0xf]
    %v140 = vld [vmem:[%s1 + $0x16c] sm:$0xf]
    %v141 = vld [vmem:[%s1 + $0x170] sm:$0xf]
    %v142 = vld [vmem:[%s1 + $0x174] sm:$0xf]
    %v143 = vld [vmem:[%s1 + $0x178] sm:$0xf]
    %v144 = vld [vmem:[%s1 + $0x17c] sm:$0xf]
    %v145 = vld [vmem:[%s1 + $0x180] sm:$0xf]
    %v146 = vld [vmem:[%s1 + $0x184] sm:$0xf]
    %v147 = vld [vmem:[%s1 + $0x188] sm:$0xf]
    %v148 = vld [vmem:[%s1 + $0x18c] sm:$0xf]
    %v149 = vld [vmem:[%s1 + $0x190] sm:$0xf]
    %v150 = vld [vmem:[%s1 + $0x194] sm:$0xf]
    %v151 = vld [vmem:[%s1 + $0x198] sm:$0xf]
    %v152 = vld [vmem:[%s1 + $0x19c] sm:$0xf]
    %v153 = vld [vmem:[%s1 + $0x1a0] sm:$0xf]
    %v154 = vld [vmem:[%s1 + $0x1a4] sm:$0xf]
    %v155 = vld [vmem:[%s1 + $0x1a8] sm:$0xf]
    %v156 = vld [vmem:[%s1 + $0x1ac] sm:$0xf]
    %v157 = vld [vmem:[%s1 + $0x1b0] sm:$0xf]
    %v158 = vld [vmem:[%s1 + $0x1b4] sm:$0xf]
    %v159 = vld [vmem:[%s1 + $0x1b8] sm:$0xf]
    %v160 = vld [vmem:[%s1 + $0x1bc] sm:$0xf]
    %v161 = vld [vmem:[%s1 + $0x1c0] sm:$0xf]
    %v162 = vld [vmem:[%s1 + $0x1c4] sm:$0xf]
    %v163 = vld [vmem:[%s1 + $0x1c8] sm:$0xf]
    %v164 = vld [vmem:[%s1 + $0x1cc] sm:$0xf]
    %v165 = vld [vmem:[%s1 + $0x1d0] sm:$0xf]
    %v166 = vld [vmem:[%s1 + $0x1d4] sm:$0xf]
    %v167 = vld [vmem:[%s1 + $0x1d8] sm:$0xf]
    %v168 = vld [vmem:[%s1 + $0x1dc] sm:$0xf]
    %v169 = vld [vmem:[%s1 + $0x1e0] sm:$0xf]
    %v170 = vld [vmem:[%s1 + $0x1e4] sm:$0xf]
    %v171 = vld [vmem:[%s1 + $0x1e8] sm:$0xf]
    %v172 = vld [vmem:[%s1 + $0x1ec] sm:$0xf]
    %v173 = vld [vmem:[%s1 + $0x1f0] sm:$0xf]
    %v174 = vld [vmem:[%s2] sm:$0x1]
    %v176 = vperm.slane %v174, 0
    %v190 = vunpack.c.l.b16 %v37
    %v191 = vunpack.c.h.b16 %v37
    %v192 = vunpack.c.l.b16 %v38
    %v193 = vunpack.c.h.b16 %v38
    %v194 = vunpack.c.l.b16 %v39
    %v195 = vunpack.c.h.b16 %v39
    %v196 = vunpack.c.l.b16 %v40
    %v197 = vunpack.c.h.b16 %v40
    %v198 = vunpack.c.l.b16 %v41
    %v199 = vunpack.c.h.b16 %v41
    %v200 = vunpack.c.l.b16 %v42
    %v201 = vunpack.c.h.b16 %v42
    %v202 = vunpack.c.l.b16 %v43
    %v203 = vunpack.c.h.b16 %v43
    %v204 = vunpack.c.l.b16 %v44
    %v205 = vunpack.c.h.b16 %v44
    %v206 = vunpack.c.l.b16 %v45
    %v207 = vunpack.c.h.b16 %v45
    %v208 = vunpack.c.l.b16 %v46
    %v209 = vunpack.c.h.b16 %v46
    %v210 = vunpack.c.l.b16 %v47
    %v211 = vunpack.c.h.b16 %v47
    %v212 = vunpack.c.l.b16 %v48
    %v213 = vunpack.c.h.b16 %v48
    %v214 = vpack.c.b16 %v198, %v190
    %v215 = vpack.c.b16 %v199, %v191
    %v216 = vpack.c.b16 %v200, %v192
    %v217 = vpack.c.b16 %v201, %v193
    %v218 = vpack.c.b16 %v202, %v194
    %v219 = vpack.c.b16 %v203, %v195
    %v220 = vpack.c.b16 %v204, %v196
    %v221 = vpack.c.b16 %v205, %v197
    %v222 = vpack.c.b16 %v206, %v206
    %v223 = vpack.c.b16 %v207, %v207
    %v224 = vpack.c.b16 %v208, %v208
    %v225 = vpack.c.b16 %v209, %v209
    %v226 = vpack.c.b16 %v210, %v210
    %v227 = vpack.c.b16 %v211, %v211
    %v228 = vpack.c.b16 %v212, %v212
    %v229 = vpack.c.b16 %v213, %v213
    %v369 = vunpack.c.l.b16 %v49
    %v370 = vunpack.c.l.b16 %v50
    %v371 = vunpack.c.l.b16 %v51
    %v372 = vunpack.c.l.b16 %v52
    %v373 = vunpack.c.l.b16 %v53
    %v374 = vunpack.c.l.b16 %v54
    %v375 = vunpack.c.l.b16 %v55
    %v376 = vunpack.c.l.b16 %v56
    %v377 = vunpack.c.l.b16 %v57
    %v378 = vunpack.c.l.b16 %v58
    %v379 = vunpack.c.l.b16 %v59
    %v380 = vunpack.c.l.b16 %v60
    %v381 = vunpack.c.l.b16 %v61
    %v382 = vunpack.c.l.b16 %v62
    %v383 = vunpack.c.l.b16 %v63
    %v384 = vunpack.c.l.b16 %v64
    %v385 = vunpack.c.l.b16 %v65
    %v386 = vunpack.c.l.b16 %v66
    %v387 = vunpack.c.l.b16 %v67
    %v388 = vunpack.c.l.b16 %v68
    %v389 = vunpack.c.l.b16 %v69
    %v390 = vunpack.c.l.b16 %v70
    %v391 = vunpack.c.l.b16 %v71
    %v392 = vunpack.c.l.b16 %v72
    %v393 = vunpack.c.l.b16 %v73
    %v394 = vunpack.c.l.b16 %v74
    %v395 = vunpack.c.l.b16 %v75
    %v396 = vunpack.c.l.b16 %v76
    %v397 = vunpack.c.l.b16 %v77
    %v398 = vunpack.c.l.b16 %v78
    %v399 = vunpack.c.l.b16 %v79
    %v400 = vunpack.c.l.b16 %v80
    %v401 = vunpack.c.l.b16 %v81
    %v402 = vunpack.c.l.b16 %v82
    %v403 = vunpack.c.l.b16 %v83
    %v404 = vunpack.c.l.b16 %v84
    %v405 = vunpack.c.l.b16 %v85
    %v406 = vunpack.c.l.b16 %v86
    %v407 = vunpack.c.l.b16 %v87
    %v408 = vunpack.c.l.b16 %v88
    %v409 = vunpack.c.l.b16 %v89
    %v410 = vunpack.c.l.b16 %v90
    %v411 = vunpack.c.l.b16 %v91
    %v412 = vunpack.c.l.b16 %v92
    %v413 = vunpack.c.l.b16 %v93
    %v414 = vunpack.c.l.b16 %v94
    %v415 = vunpack.c.l.b16 %v95
    %v416 = vunpack.c.l.b16 %v96
    %v417 = vunpack.c.l.b16 %v97
    %v418 = vunpack.c.l.b16 %v98
    %v419 = vunpack.c.l.b16 %v99
    %v420 = vunpack.c.l.b16 %v100
    %v421 = vunpack.c.l.b16 %v101
    %v422 = vunpack.c.l.b16 %v102
    %v423 = vunpack.c.l.b16 %v103
    %v424 = vunpack.c.l.b16 %v104
    %v425 = vunpack.c.l.b16 %v105
    %v426 = vunpack.c.l.b16 %v106
    %v427 = vunpack.c.l.b16 %v107
    %v428 = vunpack.c.l.b16 %v108
    %v429 = vunpack.c.l.b16 %v109
    %v430 = vunpack.c.l.b16 %v110
    %v431 = vunpack.c.l.b16 %v111
    %v432 = vunpack.c.l.b16 %v112
    %v433 = vunpack.c.l.b16 %v113
    %v434 = vunpack.c.l.b16 %v114
    %v435 = vunpack.c.l.b16 %v115
    %v436 = vunpack.c.l.b16 %v116
    %v437 = vunpack.c.l.b16 %v117
    %v438 = vunpack.c.l.b16 %v118
    %v439 = vunpack.c.l.b16 %v119
    %v440 = vunpack.c.l.b16 %v120
    %v441 = vunpack.c.l.b16 %v121
    %v442 = vunpack.c.l.b16 %v122
    %v443 = vunpack.c.l.b16 %v123
    %v444 = vunpack.c.l.b16 %v124
    %v445 = vunpack.c.l.b16 %v125
    %v446 = vunpack.c.l.b16 %v126
    %v447 = vunpack.c.l.b16 %v127
    %v448 = vunpack.c.l.b16 %v128
    %v449 = vunpack.c.l.b16 %v129
    %v450 = vunpack.c.l.b16 %v130
    %v451 = vunpack.c.l.b16 %v131
    %v452 = vunpack.c.l.b16 %v132
    %v453 = vunpack.c.l.b16 %v133
    %v454 = vunpack.c.l.b16 %v134
    %v455 = vunpack.c.l.b16 %v135
    %v456 = vunpack.c.l.b16 %v136
    %v457 = vunpack.c.l.b16 %v137
    %v458 = vunpack.c.l.b16 %v138
    %v459 = vunpack.c.l.b16 %v139
    %v460 = vunpack.c.l.b16 %v140
    %v461 = vunpack.c.l.b16 %v141
    %v462 = vunpack.c.l.b16 %v142
    %v463 = vunpack.c.l.b16 %v143
    %v464 = vunpack.c.l.b16 %v144
    %v465 = vunpack.c.l.b16 %v145
    %v466 = vunpack.c.l.b16 %v146
    %v467 = vunpack.c.l.b16 %v147
    %v468 = vunpack.c.l.b16 %v148
    %v469 = vunpack.c.l.b16 %v149
    %v470 = vunpack.c.l.b16 %v150
    %v471 = vunpack.c.l.b16 %v151
    %v472 = vunpack.c.l.b16 %v152
    %v473 = vunpack.c.l.b16 %v153
    %v474 = vunpack.c.l.b16 %v154
    %v475 = vunpack.c.l.b16 %v155
    %v476 = vunpack.c.l.b16 %v156
    %v477 = vunpack.c.l.b16 %v157
    %v478 = vunpack.c.l.b16 %v158
    %v479 = vunpack.c.l.b16 %v159
    %v480 = vunpack.c.l.b16 %v160
    %v481 = vunpack.c.l.b16 %v161
    %v482 = vunpack.c.l.b16 %v162
    %v483 = vunpack.c.l.b16 %v163
    %v484 = vunpack.c.l.b16 %v164
    %v485 = vunpack.c.l.b16 %v165
    %v486 = vunpack.c.l.b16 %v166
    %v487 = vunpack.c.l.b16 %v167
    %v488 = vunpack.c.l.b16 %v168
    %v489 = vunpack.c.l.b16 %v169
    %v490 = vunpack.c.l.b16 %v170
    %v491 = vunpack.c.l.b16 %v171
    %v492 = vunpack.c.l.b16 %v172
    %v493 = vunpack.c.l.b16 %v173
    %v494 = vpack.c.b16 %v370, %v369
    %v495 = vpack.c.b16 %v372, %v371
    %v496 = vpack.c.b16 %v374, %v373
    %v497 = vpack.c.b16 %v376, %v375
    %v498 = vpack.c.b16 %v378, %v377
    %v499 = vpack.c.b16 %v380, %v379
    %v500 = vpack.c.b16 %v382, %v381
    %v501 = vpack.c.b16 %v384, %v383
    %v502 = vpack.c.b16 %v386, %v385
    %v503 = vpack.c.b16 %v388, %v387
    %v504 = vpack.c.b16 %v390, %v389
    %v505 = vpack.c.b16 %v392, %v391
    %v506 = vpack.c.b16 %v394, %v393
    %v507 = vpack.c.b16 %v396, %v395
    %v508 = vpack.c.b16 %v398, %v397
    %v509 = vpack.c.b16 %v400, %v399
    %v510 = vpack.c.b16 %v402, %v401
    %v511 = vpack.c.b16 %v404, %v403
    %v512 = vpack.c.b16 %v406, %v405
    %v513 = vpack.c.b16 %v408, %v407
    %v514 = vpack.c.b16 %v410, %v409
    %v515 = vpack.c.b16 %v412, %v411
    %v516 = vpack.c.b16 %v414, %v413
    %v517 = vpack.c.b16 %v416, %v415
    %v518 = vpack.c.b16 %v418, %v417
    %v519 = vpack.c.b16 %v420, %v419
    %v520 = vpack.c.b16 %v422, %v421
    %v521 = vpack.c.b16 %v424, %v423
    %v522 = vpack.c.b16 %v426, %v425
    %v523 = vpack.c.b16 %v428, %v427
    %v524 = vpack.c.b16 %v430, %v429
    %v525 = vpack.c.b16 %v432, %v431
    %v526 = vpack.c.b16 %v434, %v433
    %v527 = vpack.c.b16 %v436, %v435
    %v528 = vpack.c.b16 %v438, %v437
    %v529 = vpack.c.b16 %v440, %v439
    %v530 = vpack.c.b16 %v442, %v441
    %v531 = vpack.c.b16 %v444, %v443
    %v532 = vpack.c.b16 %v446, %v445
    %v533 = vpack.c.b16 %v448, %v447
    %v534 = vpack.c.b16 %v450, %v449
    %v535 = vpack.c.b16 %v452, %v451
    %v536 = vpack.c.b16 %v454, %v453
    %v537 = vpack.c.b16 %v456, %v455
    %v538 = vpack.c.b16 %v458, %v457
    %v539 = vpack.c.b16 %v460, %v459
    %v540 = vpack.c.b16 %v462, %v461
    %v541 = vpack.c.b16 %v464, %v463
    %v542 = vpack.c.b16 %v466, %v465
    %v543 = vpack.c.b16 %v468, %v467
    %v544 = vpack.c.b16 %v470, %v469
    %v545 = vpack.c.b16 %v472, %v471
    %v546 = vpack.c.b16 %v474, %v473
    %v547 = vpack.c.b16 %v476, %v475
    %v548 = vpack.c.b16 %v478, %v477
    %v549 = vpack.c.b16 %v480, %v479
    %v550 = vpack.c.b16 %v482, %v481
    %v551 = vpack.c.b16 %v484, %v483
    %v552 = vpack.c.b16 %v486, %v485
    %v553 = vpack.c.b16 %v488, %v487
    %v554 = vpack.c.b16 %v490, %v489
    %v555 = vpack.c.b16 %v492, %v491
    %v556 = vpack.c.b16 %v493, %v493
    %vm619 = vcmask 850944
    %v621 = vsel %vm619, %v221, 0
    %v624 = vsel %vm619, %v229, 0
    %vm626 = vcmask 1043456
    %v628 = vsel %vm626, %v556, 0
    %630 = vmatpush.bf16.msra.mxu0 %v501
    %631 = vmatpush.bf16.msra.mxu0 %v500
    %632 = vmatpush.bf16.msra.mxu0 %v499
    %633 = vmatpush.bf16.msra.mxu0 %v498
    %634 = vmatpush.bf16.msra.mxu0 %v497
    %635 = vmatpush.bf16.msra.mxu0 %v496
    %636 = vmatpush.bf16.msra.mxu0 %v495
    %637 = vmatpush.bf16.msra.mxu0 %v494
    %638 = vmatmul.bf16.gmra.mxu0 %v214
    %v639 = vpop.f32.mrf.mxu0
    %v640 = vadd.f32 %v176, %v639
    %v641 = vpop.f32.mrf.mxu0
    %v642 = vadd.f32 %v176, %v641
    %643 = vmatmul.bf16.gmra.mxu0 %v222
    %v644 = vpop.f32.mrf.mxu0
    %v645 = vadd.f32 %v176, %v644
    %v646 = vpop.f32.mrf.mxu0
    %647 = vdwg.mxu0
    %648 = vmatpush.bf16.msra.mxu0 %v509
    %649 = vmatpush.bf16.msra.mxu0 %v508
    %650 = vmatpush.bf16.msra.mxu0 %v507
    %651 = vmatpush.bf16.msra.mxu0 %v506
    %652 = vmatpush.bf16.msra.mxu0 %v505
    %653 = vmatpush.bf16.msra.mxu0 %v504
    %654 = vmatpush.bf16.msra.mxu0 %v503
    %655 = vmatpush.bf16.msra.mxu0 %v502
    %656 = vmatmul.bf16.gmra.mxu0 %v215
    %v657 = vpop.f32.mrf.mxu0
    %v658 = vadd.f32 %v640, %v657
    %v659 = vpop.f32.mrf.mxu0
    %v660 = vadd.f32 %v642, %v659
    %661 = vmatmul.bf16.gmra.mxu0 %v223
    %v662 = vpop.f32.mrf.mxu0
    %v663 = vadd.f32 %v645, %v662
    %v664 = vpop.f32.mrf.mxu0
    %665 = vdwg.mxu0
    %666 = vmatpush.bf16.msra.mxu0 %v517
    %667 = vmatpush.bf16.msra.mxu0 %v516
    %668 = vmatpush.bf16.msra.mxu0 %v515
    %669 = vmatpush.bf16.msra.mxu0 %v514
    %670 = vmatpush.bf16.msra.mxu0 %v513
    %671 = vmatpush.bf16.msra.mxu0 %v512
    %672 = vmatpush.bf16.msra.mxu0 %v511
    %673 = vmatpush.bf16.msra.mxu0 %v510
    %674 = vmatmul.bf16.gmra.mxu0 %v216
    %v675 = vpop.f32.mrf.mxu0
    %v676 = vadd.f32 %v658, %v675
    %v677 = vpop.f32.mrf.mxu0
    %v678 = vadd.f32 %v660, %v677
    %679 = vmatmul.bf16.gmra.mxu0 %v224
    %v680 = vpop.f32.mrf.mxu0
    %v681 = vadd.f32 %v663, %v680
    %v682 = vpop.f32.mrf.mxu0
    %683 = vdwg.mxu0
    %684 = vmatpush.bf16.msra.mxu0 %v525
    %685 = vmatpush.bf16.msra.mxu0 %v524
    %686 = vmatpush.bf16.msra.mxu0 %v523
    %687 = vmatpush.bf16.msra.mxu0 %v522
    %688 = vmatpush.bf16.msra.mxu0 %v521
    %689 = vmatpush.bf16.msra.mxu0 %v520
    %690 = vmatpush.bf16.msra.mxu0 %v519
    %691 = vmatpush.bf16.msra.mxu0 %v518
    %692 = vmatmul.bf16.gmra.mxu0 %v217
    %v693 = vpop.f32.mrf.mxu0
    %v694 = vadd.f32 %v676, %v693
    %v695 = vpop.f32.mrf.mxu0
    %v696 = vadd.f32 %v678, %v695
    %697 = vmatmul.bf16.gmra.mxu0 %v225
    %v698 = vpop.f32.mrf.mxu0
    %v699 = vadd.f32 %v681, %v698
    %v700 = vpop.f32.mrf.mxu0
    %701 = vdwg.mxu0
    %702 = vmatpush.bf16.msra.mxu0 %v533
    %703 = vmatpush.bf16.msra.mxu0 %v532
    %704 = vmatpush.bf16.msra.mxu0 %v531
    %705 = vmatpush.bf16.msra.mxu0 %v530
    %706 = vmatpush.bf16.msra.mxu0 %v529
    %707 = vmatpush.bf16.msra.mxu0 %v528
    %708 = vmatpush.bf16.msra.mxu0 %v527
    %709 = vmatpush.bf16.msra.mxu0 %v526
    %710 = vmatmul.bf16.gmra.mxu0 %v218
    %v711 = vpop.f32.mrf.mxu0
    %v712 = vadd.f32 %v694, %v711
    %v713 = vpop.f32.mrf.mxu0
    %v714 = vadd.f32 %v696, %v713
    %715 = vmatmul.bf16.gmra.mxu0 %v226
    %v716 = vpop.f32.mrf.mxu0
    %v717 = vadd.f32 %v699, %v716
    %v718 = vpop.f32.mrf.mxu0
    %719 = vdwg.mxu0
    %720 = vmatpush.bf16.msra.mxu0 %v541
    %721 = vmatpush.bf16.msra.mxu0 %v540
    %722 = vmatpush.bf16.msra.mxu0 %v539
    %723 = vmatpush.bf16.msra.mxu0 %v538
    %724 = vmatpush.bf16.msra.mxu0 %v537
    %725 = vmatpush.bf16.msra.mxu0 %v536
    %726 = vmatpush.bf16.msra.mxu0 %v535
    %727 = vmatpush.bf16.msra.mxu0 %v534
    %728 = vmatmul.bf16.gmra.mxu0 %v219
    %v729 = vpop.f32.mrf.mxu0
    %v730 = vadd.f32 %v712, %v729
    %v731 = vpop.f32.mrf.mxu0
    %v732 = vadd.f32 %v714, %v731
    %733 = vmatmul.bf16.gmra.mxu0 %v227
    %v734 = vpop.f32.mrf.mxu0
    %v735 = vadd.f32 %v717, %v734
    %v736 = vpop.f32.mrf.mxu0
    %737 = vdwg.mxu0
    %738 = vmatpush.bf16.msra.mxu0 %v549
    %739 = vmatpush.bf16.msra.mxu0 %v548
    %740 = vmatpush.bf16.msra.mxu0 %v547
    %741 = vmatpush.bf16.msra.mxu0 %v546
    %742 = vmatpush.bf16.msra.mxu0 %v545
    %743 = vmatpush.bf16.msra.mxu0 %v544
    %744 = vmatpush.bf16.msra.mxu0 %v543
    %745 = vmatpush.bf16.msra.mxu0 %v542
    %746 = vmatmul.bf16.gmra.mxu0 %v220
    %v747 = vpop.f32.mrf.mxu0
    %v748 = vadd.f32 %v730, %v747
    %v749 = vpop.f32.mrf.mxu0
    %v750 = vadd.f32 %v732, %v749
    %751 = vmatmul.bf16.gmra.mxu0 %v228
    %v752 = vpop.f32.mrf.mxu0
    %v753 = vadd.f32 %v735, %v752
    %v754 = vpop.f32.mrf.mxu0
    %755 = vdwg.mxu0
    %756 = vmatpush.bf16.msra.mxu0 0
    %757 = vmatpush.bf16.msra.mxu0 %v628
    %758 = vmatpush.bf16.msra.mxu0 %v555
    %759 = vmatpush.bf16.msra.mxu0 %v554
    %760 = vmatpush.bf16.msra.mxu0 %v553
    %761 = vmatpush.bf16.msra.mxu0 %v552
    %762 = vmatpush.bf16.msra.mxu0 %v551
    %763 = vmatpush.bf16.msra.mxu0 %v550
    %764 = vmatmul.bf16.gmra.mxu0 %v621
    %v765 = vpop.f32.mrf.mxu0
    %v766 = vadd.f32 %v748, %v765
    %v767 = vpop.f32.mrf.mxu0
    %v768 = vadd.f32 %v750, %v767
    %769 = vmatmul.bf16.gmra.mxu0 %v624
    %v770 = vpop.f32.mrf.mxu0
    %v771 = vadd.f32 %v753, %v770
    %v772 = vpop.f32.mrf.mxu0
    %773 = vdwg.mxu0
    %v774 = vpack.c.bf16 %v768, %v766
    %v775 = vpack.c.bf16 %v771, %v771
    %v776 = vld [vmem:[%s3] sm:$0xff]
    %v777 = vld [vmem:[%s3 + $0x8] sm:$0xff]
    %v778 = vld [vmem:[%s3 + $0x10] sm:$0xff]
    %v779 = vld [vmem:[%s3 + $0x18] sm:$0xff]
    %v780 = vld [vmem:[%s3 + $0x20] sm:$0xff]
    %v781 = vld [vmem:[%s3 + $0x28] sm:$0xff]
    %v782 = vld [vmem:[%s3 + $0x30] sm:$0xff]
    %v783 = vld [vmem:[%s3 + $0x38] sm:$0xff]
    %v784 = vld [vmem:[%s4] sm:$0xf]
    %v786 = vperm.slane %v784, 0
    %v787 = vperm.slane %v784, 1
    %v788 = vperm.slane %v784, 2
    %v789 = vperm.slane %v784, 3
    %v802 = vunpack.c.l.b16 %v776
    %v803 = vunpack.c.h.b16 %v776
    %v804 = vunpack.c.l.b16 %v777
    %v805 = vunpack.c.h.b16 %v777
    %v806 = vunpack.c.l.b16 %v778
    %v807 = vunpack.c.h.b16 %v778
    %v808 = vunpack.c.l.b16 %v779
    %v809 = vunpack.c.h.b16 %v779
    %v810 = vunpack.c.l.b16 %v780
    %v811 = vunpack.c.h.b16 %v780
    %v812 = vunpack.c.l.b16 %v781
    %v813 = vunpack.c.h.b16 %v781
    %v814 = vunpack.c.l.b16 %v782
    %v815 = vunpack.c.h.b16 %v782
    %v816 = vunpack.c.l.b16 %v783
    %v817 = vunpack.c.h.b16 %v783
    %v818 = vpack.c.b16 %v806, %v802
    %v819 = vpack.c.b16 %v807, %v803
    %v820 = vpack.c.b16 %v808, %v804
    %v821 = vpack.c.b16 %v809, %v805
    %v822 = vpack.c.b16 %v814, %v810
    %v823 = vpack.c.b16 %v815, %v811
    %v824 = vpack.c.b16 %v816, %v812
    %v825 = vpack.c.b16 %v817, %v813
    %vm834 = vcmask 261120
    %v836 = vsel %vm834, %v774, 0
    %v839 = vsel %vm834, %v775, 0
    %841 = vmatpush.bf16.msra.mxu0 0
    %842 = vmatpush.bf16.msra.mxu0 0
    %843 = vmatpush.bf16.msra.mxu0 0
    %844 = vmatpush.bf16.msra.mxu0 0
    %845 = vmatpush.bf16.msra.mxu0 0
    %846 = vmatpush.bf16.msra.mxu0 0
    %847 = vmatpush.bf16.msra.mxu0 %v822
    %848 = vmatpush.bf16.msra.mxu0 %v818
    %849 = vmatmul.bf16.gmra.mxu0 %v836
    %v850 = vpop.f32.mrf.mxu0
    %v851 = vadd.f32 %v786, %v850
    %v852 = vpop.f32.mrf.mxu0
    %v853 = vadd.f32 %v786, %v852
    %854 = vmatmul.bf16.gmra.mxu0 %v839
    %v855 = vpop.f32.mrf.mxu0
    %v856 = vpop.f32.mrf.mxu0
    %857 = vdwg.mxu0
    %858 = vmatpush.bf16.msra.mxu0 0
    %859 = vmatpush.bf16.msra.mxu0 0
    %860 = vmatpush.bf16.msra.mxu0 0
    %861 = vmatpush.bf16.msra.mxu0 0
    %862 = vmatpush.bf16.msra.mxu0 0
    %863 = vmatpush.bf16.msra.mxu0 0
    %864 = vmatpush.bf16.msra.mxu0 %v823
    %865 = vmatpush.bf16.msra.mxu0 %v819
    %866 = vmatmul.bf16.gmra.mxu0 %v836
    %v867 = vpop.f32.mrf.mxu0
    %v868 = vadd.f32 %v787, %v867
    %v869 = vpop.f32.mrf.mxu0
    %v870 = vadd.f32 %v787, %v869
    %871 = vmatmul.bf16.gmra.mxu0 %v839
    %v872 = vpop.f32.mrf.mxu0
    %v873 = vpop.f32.mrf.mxu0
    %874 = vdwg.mxu0
    %875 = vmatpush.bf16.msra.mxu0 0
    %876 = vmatpush.bf16.msra.mxu0 0
    %877 = vmatpush.bf16.msra.mxu0 0
    %878 = vmatpush.bf16.msra.mxu0 0
    %879 = vmatpush.bf16.msra.mxu0 0
    %880 = vmatpush.bf16.msra.mxu0 0
    %881 = vmatpush.bf16.msra.mxu0 %v824
    %882 = vmatpush.bf16.msra.mxu0 %v820
    %883 = vmatmul.bf16.gmra.mxu0 %v836
    %v884 = vpop.f32.mrf.mxu0
    %v885 = vadd.f32 %v788, %v884
    %v886 = vpop.f32.mrf.mxu0
    %v887 = vadd.f32 %v788, %v886
    %888 = vmatmul.bf16.gmra.mxu0 %v839
    %v889 = vpop.f32.mrf.mxu0
    %v890 = vpop.f32.mrf.mxu0
    %891 = vdwg.mxu0
    %892 = vmatpush.bf16.msra.mxu0 0
    %893 = vmatpush.bf16.msra.mxu0 0
    %894 = vmatpush.bf16.msra.mxu0 0
    %895 = vmatpush.bf16.msra.mxu0 0
    %896 = vmatpush.bf16.msra.mxu0 0
    %897 = vmatpush.bf16.msra.mxu0 0
    %898 = vmatpush.bf16.msra.mxu0 %v825
    %899 = vmatpush.bf16.msra.mxu0 %v821
    %900 = vmatmul.bf16.gmra.mxu0 %v836
    %v901 = vpop.f32.mrf.mxu0
    %v902 = vpop.f32.mrf.mxu0
    %903 = vmatmul.bf16.gmra.mxu0 %v839
    %v904 = vpop.f32.mrf.mxu0
    %v905 = vadd.f32 %v789, %v904
    %v906 = vpop.f32.mrf.mxu0
    %907 = vdwg.mxu0
    %v908 = vtanh.pop %v905
    %v909 = vld [vmem:[%s6] sm:$0x7]
    %v910 = vpack.c.bf16 %v908, %v908
    %v911 = vld [vmem:[%s5] sm:$0xff]
    %v912 = vld [vmem:[%s5 + $0x8] sm:$0xf]
    %v913 = vld [vmem:[%s5 + $0xc] sm:$0xff]
    %v914 = vld [vmem:[%s5 + $0x14] sm:$0xf]
    %v915 = vld [vmem:[%s5 + $0x18] sm:$0xff]
    %v916 = vld [vmem:[%s5 + $0x20] sm:$0xf]
    %v917 = vld [vmem:[%s5 + $0x24] sm:$0xff]
    %v918 = vld [vmem:[%s5 + $0x2c] sm:$0xf]
    %v919 = vld [vmem:[%s5 + $0x30] sm:$0xff]
    %v920 = vld [vmem:[%s5 + $0x38] sm:$0xf]
    %v921 = vld [vmem:[%s5 + $0x3c] sm:$0xff]
    %v922 = vld [vmem:[%s5 + $0x44] sm:$0xf]
    %v923 = vld [vmem:[%s5 + $0x48] sm:$0xff]
    %v924 = vld [vmem:[%s5 + $0x50] sm:$0xf]
    %v925 = vld [vmem:[%s5 + $0x54] sm:$0xff]
    %v926 = vld [vmem:[%s5 + $0x5c] sm:$0xf]
    %v927 = vld [vmem:[%s5 + $0x60] sm:$0xff]
    %v928 = vld [vmem:[%s5 + $0x68] sm:$0xf]
    %v929 = vld [vmem:[%s5 + $0x6c] sm:$0xff]
    %v930 = vld [vmem:[%s5 + $0x74] sm:$0xf]
    %v931 = vld [vmem:[%s5 + $0x78] sm:$0xff]
    %v932 = vld [vmem:[%s5 + $0x80] sm:$0xf]
    %v933 = vld [vmem:[%s5 + $0x84] sm:$0xff]
    %v934 = vld [vmem:[%s5 + $0x8c] sm:$0xf]
    %v935 = vld [vmem:[%s5 + $0x90] sm:$0xff]
    %v936 = vld [vmem:[%s5 + $0x98] sm:$0xf]
    %v937 = vld [vmem:[%s5 + $0x9c] sm:$0xff]
    %v938 = vld [vmem:[%s5 + $0xa4] sm:$0xf]
    %v939 = vld [vmem:[%s5 + $0xa8] sm:$0xff]
    %v940 = vld [vmem:[%s5 + $0xb0] sm:$0xf]
    %v941 = vld [vmem:[%s5 + $0xb4] sm:$0xff]
    %v942 = vld [vmem:[%s5 + $0xbc] sm:$0xf]
    %v944 = vperm.slane %v909, 0
    %v945 = vperm.slane %v909, 1
    %v946 = vperm.slane %v909, 2
    %v982 = vunpack.c.l.b16 %v911
    %v983 = vunpack.c.h.b16 %v911
    %v984 = vunpack.c.l.b16 %v912
    %v985 = vunpack.c.l.b16 %v913
    %v986 = vunpack.c.h.b16 %v913
    %v987 = vunpack.c.l.b16 %v914
    %v988 = vunpack.c.l.b16 %v915
    %v989 = vunpack.c.h.b16 %v915
    %v990 = vunpack.c.l.b16 %v916
    %v991 = vunpack.c.l.b16 %v917
    %v992 = vunpack.c.h.b16 %v917
    %v993 = vunpack.c.l.b16 %v918
    %v994 = vunpack.c.l.b16 %v919
    %v995 = vunpack.c.h.b16 %v919
    %v996 = vunpack.c.l.b16 %v920
    %v997 = vunpack.c.l.b16 %v921
    %v998 = vunpack.c.h.b16 %v921
    %v999 = vunpack.c.l.b16 %v922
    %v1000 = vunpack.c.l.b16 %v923
    %v1001 = vunpack.c.h.b16 %v923
    %v1002 = vunpack.c.l.b16 %v924
    %v1003 = vunpack.c.l.b16 %v925
    %v1004 = vunpack.c.h.b16 %v925
    %v1005 = vunpack.c.l.b16 %v926
    %v1006 = vunpack.c.l.b16 %v927
    %v1007 = vunpack.c.h.b16 %v927
    %v1008 = vunpack.c.l.b16 %v928
    %v1009 = vunpack.c.l.b16 %v929
    %v1010 = vunpack.c.h.b16 %v929
    %v1011 = vunpack.c.l.b16 %v930
    %v1012 = vunpack.c.l.b16 %v931
    %v1013 = vunpack.c.h.b16 %v931
    %v1014 = vunpack.c.l.b16 %v932
    %v1015 = vunpack.c.l.b16 %v933
    %v1016 = vunpack.c.h.b16 %v933
    %v1017 = vunpack.c.l.b16 %v934
    %v1018 = vunpack.c.l.b16 %v935
    %v1019 = vunpack.c.h.b16 %v935
    %v1020 = vunpack.c.l.b16 %v936
    %v1021 = vunpack.c.l.b16 %v937
    %v1022 = vunpack.c.h.b16 %v937
    %v1023 = vunpack.c.l.b16 %v938
    %v1024 = vunpack.c.l.b16 %v939
    %v1025 = vunpack.c.h.b16 %v939
    %v1026 = vunpack.c.l.b16 %v940
    %v1027 = vunpack.c.l.b16 %v941
    %v1028 = vunpack.c.h.b16 %v941
    %v1029 = vunpack.c.l.b16 %v942
    %v1030 = vpack.c.b16 %v985, %v982
    %v1031 = vpack.c.b16 %v986, %v983
    %v1032 = vpack.c.b16 %v987, %v984
    %v1033 = vpack.c.b16 %v991, %v988
    %v1034 = vpack.c.b16 %v992, %v989
    %v1035 = vpack.c.b16 %v993, %v990
    %v1036 = vpack.c.b16 %v997, %v994
    %v1037 = vpack.c.b16 %v998, %v995
    %v1038 = vpack.c.b16 %v999, %v996
    %v1039 = vpack.c.b16 %v1003, %v1000
    %v1040 = vpack.c.b16 %v1004, %v1001
    %v1041 = vpack.c.b16 %v1005, %v1002
    %v1042 = vpack.c.b16 %v1009, %v1006
    %v1043 = vpack.c.b16 %v1010, %v1007
    %v1044 = vpack.c.b16 %v1011, %v1008
    %v1045 = vpack.c.b16 %v1015, %v1012
    %v1046 = vpack.c.b16 %v1016, %v1013
    %v1047 = vpack.c.b16 %v1017, %v1014
    %v1048 = vpack.c.b16 %v1021, %v1018
    %v1049 = vpack.c.b16 %v1022, %v1019
    %v1050 = vpack.c.b16 %v1023, %v1020
    %v1051 = vpack.c.b16 %v1027, %v1024
    %v1052 = vpack.c.b16 %v1028, %v1025
    %v1053 = vpack.c.b16 %v1029, %v1026
    %1078 = vmatpush.bf16.msra.mxu0 %v1051
    %1079 = vmatpush.bf16.msra.mxu0 %v1048
    %1080 = vmatpush.bf16.msra.mxu0 %v1045
    %1081 = vmatpush.bf16.msra.mxu0 %v1042
    %1082 = vmatpush.bf16.msra.mxu0 %v1039
    %1083 = vmatpush.bf16.msra.mxu0 %v1036
    %1084 = vmatpush.bf16.msra.mxu0 %v1033
    %1085 = vmatpush.bf16.msra.mxu0 %v1030
    %1086 = vmatmul.bf16.gmra.mxu0 %v910
    %v1087 = vpop.f32.mrf.mxu0
    %v1088 = vadd.f32 %v944, %v1087
    %v1089 = vpop.f32.mrf.mxu0
    %1090 = vdwg.mxu0
    %1091 = vmatpush.bf16.msra.mxu0 %v1052
    %1092 = vmatpush.bf16.msra.mxu0 %v1049
    %1093 = vmatpush.bf16.msra.mxu0 %v1046
    %1094 = vmatpush.bf16.msra.mxu0 %v1043
    %1095 = vmatpush.bf16.msra.mxu0 %v1040
    %1096 = vmatpush.bf16.msra.mxu0 %v1037
    %1097 = vmatpush.bf16.msra.mxu0 %v1034
    %1098 = vmatpush.bf16.msra.mxu0 %v1031
    %1099 = vmatmul.bf16.gmra.mxu0 %v910
    %v1100 = vpop.f32.mrf.mxu0
    %v1101 = vadd.f32 %v945, %v1100
    %v1102 = vpop.f32.mrf.mxu0
    %1103 = vdwg.mxu0
    %1104 = vmatpush.bf16.msra.mxu0 %v1053
    %1105 = vmatpush.bf16.msra.mxu0 %v1050
    %1106 = vmatpush.bf16.msra.mxu0 %v1047
    %1107 = vmatpush.bf16.msra.mxu0 %v1044
    %1108 = vmatpush.bf16.msra.mxu0 %v1041
    %1109 = vmatpush.bf16.msra.mxu0 %v1038
    %1110 = vmatpush.bf16.msra.mxu0 %v1035
    %1111 = vmatpush.bf16.msra.mxu0 %v1032
    %1112 = vmatmul.bf16.gmra.mxu0 %v910
    %v1113 = vpop.f32.mrf.mxu0
    %v1114 = vadd.f32 %v946, %v1113
    %v1115 = vpop.f32.mrf.mxu0
    %1116 = vdwg.mxu0
    %v1117 = vadd.f32 %v851, %v1088
    %v1118 = vxor.u32 %v1117, 2147483648
    %v1119 = vmul.f32 %v1118, 1.442695
    %v1120 = vpow.pop %v1119
    %v1121 = vadd.f32 %v1120, 1.0
    %v1122 = vrcp.pop %v1121
    %v1123 = vmul.f32 %v1121, %v1122
    %v1124 = vsub.f32 1.0, %v1123
    %v1125 = vmul.f32 %v1122, %v1124
    %v1126 = vadd.f32 %v1122, %v1125
    %vm1127 = vweird.f32 %v1121
    %vm1128 = vweird.f32 %v1122
    %vm1129 = vmor %vm1127, %vm1128
    %v1130 = vsel %vm1129, %v1122, %v1126
    %v1131 = vand.u32 2147483647, %v1121
    %vm1132 = vcmp.eq.f32.partialorder %v1131, 8.507059e+37
    %v1133 = vand.u32 %v1121, 2147483648
    %v1134 = vor.u32 1.1754944e-38, %v1133
    %v1135 = vsel %vm1132, %v1134, %v1130
    %v1136 = vmul.f32 1.0, %v1135
    %v1137 = vadd.f32 %v868, %v1101
    %v1138 = vxor.u32 %v1137, 2147483648
    %v1139 = vmul.f32 %v1138, 1.442695
    %v1140 = vpow.pop %v1139
    %v1141 = vadd.f32 %v1140, 1.0
    %v1142 = vrcp.pop %v1141
    %v1143 = vmul.f32 %v1141, %v1142
    %v1144 = vsub.f32 1.0, %v1143
    %v1145 = vmul.f32 %v1142, %v1144
    %v1146 = vadd.f32 %v1142, %v1145
    %vm1147 = vweird.f32 %v1141
    %vm1148 = vweird.f32 %v1142
    %vm1149 = vmor %vm1147, %vm1148
    %v1150 = vsel %vm1149, %v1142, %v1146
    %v1151 = vand.u32 2147483647, %v1141
    %vm1152 = vcmp.eq.f32.partialorder %v1151, 8.507059e+37
    %v1153 = vand.u32 %v1141, 2147483648
    %v1154 = vor.u32 1.1754944e-38, %v1153
    %v1155 = vsel %vm1152, %v1154, %v1150
    %v1156 = vmul.f32 1.0, %v1155
    %v1157 = vmul.f32 %v1136, %v1114
    %v1158 = vadd.f32 %v885, %v1157
    %v1159 = vtanh.pop %v1158
    %v1160 = vsub.f32 1.0, %v1156
    %v1161 = vmul.f32 %v1160, %v1159
    %v1162 = vmul.f32 %v1156, %v908
    %v1163 = vadd.f32 %v1161, %v1162
    %v1164 = vpack.c.bf16 %v1163, %v1163
    %1165 = vmatpush.bf16.msra.mxu0 %v1051
    %1166 = vmatpush.bf16.msra.mxu0 %v1048
    %1167 = vmatpush.bf16.msra.mxu0 %v1045
    %1168 = vmatpush.bf16.msra.mxu0 %v1042
    %1169 = vmatpush.bf16.msra.mxu0 %v1039
    %1170 = vmatpush.bf16.msra.mxu0 %v1036
    %1171 = vmatpush.bf16.msra.mxu0 %v1033
    %1172 = vmatpush.bf16.msra.mxu0 %v1030
    %1173 = vmatmul.bf16.gmra.mxu0 %v1164
    %v1174 = vpop.f32.mrf.mxu0
    %v1175 = vadd.f32 %v944, %v1174
    %v1176 = vpop.f32.mrf.mxu0
    %1177 = vdwg.mxu0
    %1178 = vmatpush.bf16.msra.mxu0 %v1052
    %1179 = vmatpush.bf16.msra.mxu0 %v1049
    %1180 = vmatpush.bf16.msra.mxu0 %v1046
    %1181 = vmatpush.bf16.msra.mxu0 %v1043
    %1182 = vmatpush.bf16.msra.mxu0 %v1040
    %1183 = vmatpush.bf16.msra.mxu0 %v1037
    %1184 = vmatpush.bf16.msra.mxu0 %v1034
    %1185 = vmatpush.bf16.msra.mxu0 %v1031
    %1186 = vmatmul.bf16.gmra.mxu0 %v1164
    %v1187 = vpop.f32.mrf.mxu0
    %v1188 = vadd.f32 %v945, %v1187
    %v1189 = vpop.f32.mrf.mxu0
    %1190 = vdwg.mxu0
    %1191 = vmatpush.bf16.msra.mxu0 %v1053
    %1192 = vmatpush.bf16.msra.mxu0 %v1050
    %1193 = vmatpush.bf16.msra.mxu0 %v1047
    %1194 = vmatpush.bf16.msra.mxu0 %v1044
    %1195 = vmatpush.bf16.msra.mxu0 %v1041
    %1196 = vmatpush.bf16.msra.mxu0 %v1038
    %1197 = vmatpush.bf16.msra.mxu0 %v1035
    %1198 = vmatpush.bf16.msra.mxu0 %v1032
    %1199 = vmatmul.bf16.gmra.mxu0 %v1164
    %v1200 = vpop.f32.mrf.mxu0
    %v1201 = vadd.f32 %v946, %v1200
    %v1202 = vpop.f32.mrf.mxu0
    %1203 = vdwg.mxu0
    %v1205 = vrot.slane %v1175, 6
    %v1207 = vadd.f32 %v851, %v1205
    %v1208 = vxor.u32 %v1207, 2147483648
    %v1209 = vmul.f32 %v1208, 1.442695
    %v1210 = vpow.pop %v1209
    %v1211 = vadd.f32 %v1210, 1.0
    %v1212 = vrcp.pop %v1211
    %v1213 = vmul.f32 %v1211, %v1212
    %v1214 = vsub.f32 1.0, %v1213
    %v1215 = vmul.f32 %v1212, %v1214
    %v1216 = vadd.f32 %v1212, %v1215
    %vm1217 = vweird.f32 %v1211
    %vm1218 = vweird.f32 %v1212
    %vm1219 = vmor %vm1217, %vm1218
    %v1220 = vsel %vm1219, %v1212, %v1216
    %v1221 = vand.u32 2147483647, %v1211
    %vm1222 = vcmp.eq.f32.partialorder %v1221, 8.507059e+37
    %v1223 = vand.u32 %v1211, 2147483648
    %v1224 = vor.u32 1.1754944e-38, %v1223
    %v1225 = vsel %vm1222, %v1224, %v1220
    %v1226 = vmul.f32 1.0, %v1225
    %v1228 = vrot.slane %v1188, 6
    %v1230 = vadd.f32 %v868, %v1228
    %v1231 = vxor.u32 %v1230, 2147483648
    %v1232 = vmul.f32 %v1231, 1.442695
    %v1233 = vpow.pop %v1232
    %v1234 = vadd.f32 %v1233, 1.0
    %v1235 = vrcp.pop %v1234
    %v1236 = vmul.f32 %v1234, %v1235
    %v1237 = vsub.f32 1.0, %v1236
    %v1238 = vmul.f32 %v1235, %v1237
    %v1239 = vadd.f32 %v1235, %v1238
    %vm1240 = vweird.f32 %v1234
    %vm1241 = vweird.f32 %v1235
    %vm1242 = vmor %vm1240, %vm1241
    %v1243 = vsel %vm1242, %v1235, %v1239
    %v1244 = vand.u32 2147483647, %v1234
    %vm1245 = vcmp.eq.f32.partialorder %v1244, 8.507059e+37
    %v1246 = vand.u32 %v1234, 2147483648
    %v1247 = vor.u32 1.1754944e-38, %v1246
    %v1248 = vsel %vm1245, %v1247, %v1243
    %v1249 = vmul.f32 1.0, %v1248
    %v1251 = vrot.slane %v1201, 6
    %v1253 = vmul.f32 %v1226, %v1251
    %v1254 = vadd.f32 %v885, %v1253
    %v1255 = vtanh.pop %v1254
    %v1256 = vsub.f32 1.0, %v1249
    %v1257 = vmul.f32 %v1256, %v1255
    %v1259 = vrot.slane %v1163, 6
    %v1261 = vmul.f32 %v1249, %v1259
    %v1262 = vadd.f32 %v1257, %v1261
    %v1263 = vpack.c.bf16 %v1262, %v1262
    %v1265 = vrot.slane %v1263, 1
    %1267 = vmatpush.bf16.msra.mxu0 %v1051
    %1268 = vmatpush.bf16.msra.mxu0 %v1048
    %1269 = vmatpush.bf16.msra.mxu0 %v1045
    %1270 = vmatpush.bf16.msra.mxu0 %v1042
    %1271 = vmatpush.bf16.msra.mxu0 %v1039
    %1272 = vmatpush.bf16.msra.mxu0 %v1036
    %1273 = vmatpush.bf16.msra.mxu0 %v1033
    %1274 = vmatpush.bf16.msra.mxu0 %v1030
    %1275 = vmatmul.bf16.gmra.mxu0 %v1265
    %v1276 = vpop.f32.mrf.mxu0
    %v1277 = vadd.f32 %v944, %v1276
    %v1278 = vpop.f32.mrf.mxu0
    %1279 = vdwg.mxu0
    %1280 = vmatpush.bf16.msra.mxu0 %v1052
    %1281 = vmatpush.bf16.msra.mxu0 %v1049
    %1282 = vmatpush.bf16.msra.mxu0 %v1046
    %1283 = vmatpush.bf16.msra.mxu0 %v1043
    %1284 = vmatpush.bf16.msra.mxu0 %v1040
    %1285 = vmatpush.bf16.msra.mxu0 %v1037
    %1286 = vmatpush.bf16.msra.mxu0 %v1034
    %1287 = vmatpush.bf16.msra.mxu0 %v1031
    %1288 = vmatmul.bf16.gmra.mxu0 %v1265
    %v1289 = vpop.f32.mrf.mxu0
    %v1290 = vadd.f32 %v945, %v1289
    %v1291 = vpop.f32.mrf.mxu0
    %1292 = vdwg.mxu0
    %1293 = vmatpush.bf16.msra.mxu0 %v1053
    %1294 = vmatpush.bf16.msra.mxu0 %v1050
    %1295 = vmatpush.bf16.msra.mxu0 %v1047
    %1296 = vmatpush.bf16.msra.mxu0 %v1044
    %1297 = vmatpush.bf16.msra.mxu0 %v1041
    %1298 = vmatpush.bf16.msra.mxu0 %v1038
    %1299 = vmatpush.bf16.msra.mxu0 %v1035
    %1300 = vmatpush.bf16.msra.mxu0 %v1032
    %1301 = vmatmul.bf16.gmra.mxu0 %v1265
    %v1302 = vpop.f32.mrf.mxu0
    %v1303 = vadd.f32 %v946, %v1302
    %v1304 = vpop.f32.mrf.mxu0
    %1305 = vdwg.mxu0
    %v1307 = vrot.slane %v1277, 4
    %v1309 = vadd.f32 %v851, %v1307
    %v1310 = vxor.u32 %v1309, 2147483648
    %v1311 = vmul.f32 %v1310, 1.442695
    %v1312 = vpow.pop %v1311
    %v1313 = vadd.f32 %v1312, 1.0
    %v1314 = vrcp.pop %v1313
    %v1315 = vmul.f32 %v1313, %v1314
    %v1316 = vsub.f32 1.0, %v1315
    %v1317 = vmul.f32 %v1314, %v1316
    %v1318 = vadd.f32 %v1314, %v1317
    %vm1319 = vweird.f32 %v1313
    %vm1320 = vweird.f32 %v1314
    %vm1321 = vmor %vm1319, %vm1320
    %v1322 = vsel %vm1321, %v1314, %v1318
    %v1323 = vand.u32 2147483647, %v1313
    %vm1324 = vcmp.eq.f32.partialorder %v1323, 8.507059e+37
    %v1325 = vand.u32 %v1313, 2147483648
    %v1326 = vor.u32 1.1754944e-38, %v1325
    %v1327 = vsel %vm1324, %v1326, %v1322
    %v1328 = vmul.f32 1.0, %v1327
    %v1330 = vrot.slane %v1290, 4
    %v1332 = vadd.f32 %v868, %v1330
    %v1333 = vxor.u32 %v1332, 2147483648
    %v1334 = vmul.f32 %v1333, 1.442695
    %v1335 = vpow.pop %v1334
    %v1336 = vadd.f32 %v1335, 1.0
    %v1337 = vrcp.pop %v1336
    %v1338 = vmul.f32 %v1336, %v1337
    %v1339 = vsub.f32 1.0, %v1338
    %v1340 = vmul.f32 %v1337, %v1339
    %v1341 = vadd.f32 %v1337, %v1340
    %vm1342 = vweird.f32 %v1336
    %vm1343 = vweird.f32 %v1337
    %vm1344 = vmor %vm1342, %vm1343
    %v1345 = vsel %vm1344, %v1337, %v1341
    %v1346 = vand.u32 2147483647, %v1336
    %vm1347 = vcmp.eq.f32.partialorder %v1346, 8.507059e+37
    %v1348 = vand.u32 %v1336, 2147483648
    %v1349 = vor.u32 1.1754944e-38, %v1348
    %v1350 = vsel %vm1347, %v1349, %v1345
    %v1351 = vmul.f32 1.0, %v1350
    %v1353 = vrot.slane %v1303, 4
    %v1355 = vmul.f32 %v1328, %v1353
    %v1356 = vadd.f32 %v885, %v1355
    %v1357 = vtanh.pop %v1356
    %v1358 = vsub.f32 1.0, %v1351
    %v1359 = vmul.f32 %v1358, %v1357
    %v1361 = vrot.slane %v1262, 6
    %v1363 = vmul.f32 %v1351, %v1361
    %v1364 = vadd.f32 %v1359, %v1363
    %v1365 = vpack.c.bf16 %v1364, %v1364
    %v1367 = vrot.slane %v1365, 2
    %1369 = vmatpush.bf16.msra.mxu0 %v1051
    %1370 = vmatpush.bf16.msra.mxu0 %v1048
    %1371 = vmatpush.bf16.msra.mxu0 %v1045
    %1372 = vmatpush.bf16.msra.mxu0 %v1042
    %1373 = vmatpush.bf16.msra.mxu0 %v1039
    %1374 = vmatpush.bf16.msra.mxu0 %v1036
    %1375 = vmatpush.bf16.msra.mxu0 %v1033
    %1376 = vmatpush.bf16.msra.mxu0 %v1030
    %1377 = vmatmul.bf16.gmra.mxu0 %v1367
    %v1378 = vpop.f32.mrf.mxu0
    %v1379 = vadd.f32 %v944, %v1378
    %v1380 = vpop.f32.mrf.mxu0
    %1381 = vdwg.mxu0
    %1382 = vmatpush.bf16.msra.mxu0 %v1052
    %1383 = vmatpush.bf16.msra.mxu0 %v1049
    %1384 = vmatpush.bf16.msra.mxu0 %v1046
    %1385 = vmatpush.bf16.msra.mxu0 %v1043
    %1386 = vmatpush.bf16.msra.mxu0 %v1040
    %1387 = vmatpush.bf16.msra.mxu0 %v1037
    %1388 = vmatpush.bf16.msra.mxu0 %v1034
    %1389 = vmatpush.bf16.msra.mxu0 %v1031
    %1390 = vmatmul.bf16.gmra.mxu0 %v1367
    %v1391 = vpop.f32.mrf.mxu0
    %v1392 = vadd.f32 %v945, %v1391
    %v1393 = vpop.f32.mrf.mxu0
    %1394 = vdwg.mxu0
    %1395 = vmatpush.bf16.msra.mxu0 %v1053
    %1396 = vmatpush.bf16.msra.mxu0 %v1050
    %1397 = vmatpush.bf16.msra.mxu0 %v1047
    %1398 = vmatpush.bf16.msra.mxu0 %v1044
    %1399 = vmatpush.bf16.msra.mxu0 %v1041
    %1400 = vmatpush.bf16.msra.mxu0 %v1038
    %1401 = vmatpush.bf16.msra.mxu0 %v1035
    %1402 = vmatpush.bf16.msra.mxu0 %v1032
    %1403 = vmatmul.bf16.gmra.mxu0 %v1367
    %v1404 = vpop.f32.mrf.mxu0
    %v1405 = vadd.f32 %v946, %v1404
    %v1406 = vpop.f32.mrf.mxu0
    %1407 = vdwg.mxu0
    %v1409 = vrot.slane %v1379, 2
    %v1411 = vadd.f32 %v851, %v1409
    %v1412 = vxor.u32 %v1411, 2147483648
    %v1413 = vmul.f32 %v1412, 1.442695
    %v1414 = vpow.pop %v1413
    %v1415 = vadd.f32 %v1414, 1.0
    %v1416 = vrcp.pop %v1415
    %v1417 = vmul.f32 %v1415, %v1416
    %v1418 = vsub.f32 1.0, %v1417
    %v1419 = vmul.f32 %v1416, %v1418
    %v1420 = vadd.f32 %v1416, %v1419
    %vm1421 = vweird.f32 %v1415
    %vm1422 = vweird.f32 %v1416
    %vm1423 = vmor %vm1421, %vm1422
    %v1424 = vsel %vm1423, %v1416, %v1420
    %v1425 = vand.u32 2147483647, %v1415
    %vm1426 = vcmp.eq.f32.partialorder %v1425, 8.507059e+37
    %v1427 = vand.u32 %v1415, 2147483648
    %v1428 = vor.u32 1.1754944e-38, %v1427
    %v1429 = vsel %vm1426, %v1428, %v1424
    %v1430 = vmul.f32 1.0, %v1429
    %v1432 = vrot.slane %v1392, 2
    %v1434 = vadd.f32 %v868, %v1432
    %v1435 = vxor.u32 %v1434, 2147483648
    %v1436 = vmul.f32 %v1435, 1.442695
    %v1437 = vpow.pop %v1436
    %v1438 = vadd.f32 %v1437, 1.0
    %v1439 = vrcp.pop %v1438
    %v1440 = vmul.f32 %v1438, %v1439
    %v1441 = vsub.f32 1.0, %v1440
    %v1442 = vmul.f32 %v1439, %v1441
    %v1443 = vadd.f32 %v1439, %v1442
    %vm1444 = vweird.f32 %v1438
    %vm1445 = vweird.f32 %v1439
    %vm1446 = vmor %vm1444, %vm1445
    %v1447 = vsel %vm1446, %v1439, %v1443
    %v1448 = vand.u32 2147483647, %v1438
    %vm1449 = vcmp.eq.f32.partialorder %v1448, 8.507059e+37
    %v1450 = vand.u32 %v1438, 2147483648
    %v1451 = vor.u32 1.1754944e-38, %v1450
    %v1452 = vsel %vm1449, %v1451, %v1447
    %v1453 = vmul.f32 1.0, %v1452
    %v1455 = vrot.slane %v1405, 2
    %v1457 = vmul.f32 %v1430, %v1455
    %v1458 = vadd.f32 %v885, %v1457
    %v1459 = vtanh.pop %v1458
    %v1460 = vsub.f32 1.0, %v1453
    %v1461 = vmul.f32 %v1460, %v1459
    %v1463 = vrot.slane %v1364, 6
    %v1465 = vmul.f32 %v1453, %v1463
    %v1466 = vadd.f32 %v1461, %v1465
    %v1467 = vpack.c.bf16 %v1466, %v1466
    %v1469 = vrot.slane %v1467, 3
    %1471 = vmatpush.bf16.msra.mxu0 %v1051
    %1472 = vmatpush.bf16.msra.mxu0 %v1048
    %1473 = vmatpush.bf16.msra.mxu0 %v1045
    %1474 = vmatpush.bf16.msra.mxu0 %v1042
    %1475 = vmatpush.bf16.msra.mxu0 %v1039
    %1476 = vmatpush.bf16.msra.mxu0 %v1036
    %1477 = vmatpush.bf16.msra.mxu0 %v1033
    %1478 = vmatpush.bf16.msra.mxu0 %v1030
    %1479 = vmatmul.bf16.gmra.mxu0 %v1469
    %v1480 = vpop.f32.mrf.mxu0
    %v1481 = vadd.f32 %v944, %v1480
    %v1482 = vpop.f32.mrf.mxu0
    %1483 = vdwg.mxu0
    %1484 = vmatpush.bf16.msra.mxu0 %v1052
    %1485 = vmatpush.bf16.msra.mxu0 %v1049
    %1486 = vmatpush.bf16.msra.mxu0 %v1046
    %1487 = vmatpush.bf16.msra.mxu0 %v1043
    %1488 = vmatpush.bf16.msra.mxu0 %v1040
    %1489 = vmatpush.bf16.msra.mxu0 %v1037
    %1490 = vmatpush.bf16.msra.mxu0 %v1034
    %1491 = vmatpush.bf16.msra.mxu0 %v1031
    %1492 = vmatmul.bf16.gmra.mxu0 %v1469
    %v1493 = vpop.f32.mrf.mxu0
    %v1494 = vadd.f32 %v945, %v1493
    %v1495 = vpop.f32.mrf.mxu0
    %1496 = vdwg.mxu0
    %1497 = vmatpush.bf16.msra.mxu0 %v1053
    %1498 = vmatpush.bf16.msra.mxu0 %v1050
    %1499 = vmatpush.bf16.msra.mxu0 %v1047
    %1500 = vmatpush.bf16.msra.mxu0 %v1044
    %1501 = vmatpush.bf16.msra.mxu0 %v1041
    %1502 = vmatpush.bf16.msra.mxu0 %v1038
    %1503 = vmatpush.bf16.msra.mxu0 %v1035
    %1504 = vmatpush.bf16.msra.mxu0 %v1032
    %1505 = vmatmul.bf16.gmra.mxu0 %v1469
    %v1506 = vpop.f32.mrf.mxu0
    %v1507 = vadd.f32 %v946, %v1506
    %v1508 = vpop.f32.mrf.mxu0
    %1509 = vdwg.mxu0
    %v1510 = vadd.f32 %v853, %v1481
    %v1511 = vxor.u32 %v1510, 2147483648
    %v1512 = vmul.f32 %v1511, 1.442695
    %v1513 = vpow.pop %v1512
    %v1514 = vadd.f32 %v1513, 1.0
    %v1515 = vrcp.pop %v1514
    %v1516 = vmul.f32 %v1514, %v1515
    %v1517 = vsub.f32 1.0, %v1516
    %v1518 = vmul.f32 %v1515, %v1517
    %v1519 = vadd.f32 %v1515, %v1518
    %vm1520 = vweird.f32 %v1514
    %vm1521 = vweird.f32 %v1515
    %vm1522 = vmor %vm1520, %vm1521
    %v1523 = vsel %vm1522, %v1515, %v1519
    %v1524 = vand.u32 2147483647, %v1514
    %vm1525 = vcmp.eq.f32.partialorder %v1524, 8.507059e+37
    %v1526 = vand.u32 %v1514, 2147483648
    %v1527 = vor.u32 1.1754944e-38, %v1526
    %v1528 = vsel %vm1525, %v1527, %v1523
    %v1529 = vmul.f32 1.0, %v1528
    %v1530 = vadd.f32 %v870, %v1494
    %v1531 = vxor.u32 %v1530, 2147483648
    %v1532 = vmul.f32 %v1531, 1.442695
    %v1533 = vpow.pop %v1532
    %v1534 = vadd.f32 %v1533, 1.0
    %v1535 = vrcp.pop %v1534
    %v1536 = vmul.f32 %v1534, %v1535
    %v1537 = vsub.f32 1.0, %v1536
    %v1538 = vmul.f32 %v1535, %v1537
    %v1539 = vadd.f32 %v1535, %v1538
    %vm1540 = vweird.f32 %v1534
    %vm1541 = vweird.f32 %v1535
    %vm1542 = vmor %vm1540, %vm1541
    %v1543 = vsel %vm1542, %v1535, %v1539
    %v1544 = vand.u32 2147483647, %v1534
    %vm1545 = vcmp.eq.f32.partialorder %v1544, 8.507059e+37
    %v1546 = vand.u32 %v1534, 2147483648
    %v1547 = vor.u32 1.1754944e-38, %v1546
    %v1548 = vsel %vm1545, %v1547, %v1543
    %v1549 = vmul.f32 1.0, %v1548
    %v1550 = vmul.f32 %v1529, %v1507
    %v1551 = vadd.f32 %v887, %v1550
    %v1552 = vtanh.pop %v1551
    %v1553 = vsub.f32 1.0, %v1549
    %v1554 = vmul.f32 %v1553, %v1552
    %v1556 = vrot.slane %v1466, 6
    %v1558 = vmul.f32 %v1549, %v1556
    %v1559 = vadd.f32 %v1554, %v1558
    %v1560 = vpack.c.bf16 %v1559, %v1559
    %1561 = vmatpush.bf16.msra.mxu0 %v1051
    %1562 = vmatpush.bf16.msra.mxu0 %v1048
    %1563 = vmatpush.bf16.msra.mxu0 %v1045
    %1564 = vmatpush.bf16.msra.mxu0 %v1042
    %1565 = vmatpush.bf16.msra.mxu0 %v1039
    %1566 = vmatpush.bf16.msra.mxu0 %v1036
    %1567 = vmatpush.bf16.msra.mxu0 %v1033
    %1568 = vmatpush.bf16.msra.mxu0 %v1030
    %1569 = vmatmul.bf16.gmra.mxu0 %v1560
    %v1570 = vpop.f32.mrf.mxu0
    %v1571 = vadd.f32 %v944, %v1570
    %v1572 = vpop.f32.mrf.mxu0
    %1573 = vdwg.mxu0
    %1574 = vmatpush.bf16.msra.mxu0 %v1052
    %1575 = vmatpush.bf16.msra.mxu0 %v1049
    %1576 = vmatpush.bf16.msra.mxu0 %v1046
    %1577 = vmatpush.bf16.msra.mxu0 %v1043
    %1578 = vmatpush.bf16.msra.mxu0 %v1040
    %1579 = vmatpush.bf16.msra.mxu0 %v1037
    %1580 = vmatpush.bf16.msra.mxu0 %v1034
    %1581 = vmatpush.bf16.msra.mxu0 %v1031
    %1582 = vmatmul.bf16.gmra.mxu0 %v1560
    %v1583 = vpop.f32.mrf.mxu0
    %v1584 = vadd.f32 %v945, %v1583
    %v1585 = vpop.f32.mrf.mxu0
    %1586 = vdwg.mxu0
    %1587 = vmatpush.bf16.msra.mxu0 %v1053
    %1588 = vmatpush.bf16.msra.mxu0 %v1050
    %1589 = vmatpush.bf16.msra.mxu0 %v1047
    %1590 = vmatpush.bf16.msra.mxu0 %v1044
    %1591 = vmatpush.bf16.msra.mxu0 %v1041
    %1592 = vmatpush.bf16.msra.mxu0 %v1038
    %1593 = vmatpush.bf16.msra.mxu0 %v1035
    %1594 = vmatpush.bf16.msra.mxu0 %v1032
    %1595 = vmatmul.bf16.gmra.mxu0 %v1560
    %v1596 = vpop.f32.mrf.mxu0
    %v1597 = vadd.f32 %v946, %v1596
    %v1598 = vpop.f32.mrf.mxu0
    %1599 = vdwg.mxu0
    %v1601 = vrot.slane %v1571, 6
    %v1603 = vadd.f32 %v853, %v1601
    %v1604 = vxor.u32 %v1603, 2147483648
    %v1605 = vmul.f32 %v1604, 1.442695
    %v1606 = vpow.pop %v1605
    %v1607 = vadd.f32 %v1606, 1.0
    %v1608 = vrcp.pop %v1607
    %v1609 = vmul.f32 %v1607, %v1608
    %v1610 = vsub.f32 1.0, %v1609
    %v1611 = vmul.f32 %v1608, %v1610
    %v1612 = vadd.f32 %v1608, %v1611
    %vm1613 = vweird.f32 %v1607
    %vm1614 = vweird.f32 %v1608
    %vm1615 = vmor %vm1613, %vm1614
    %v1616 = vsel %vm1615, %v1608, %v1612
    %v1617 = vand.u32 2147483647, %v1607
    %vm1618 = vcmp.eq.f32.partialorder %v1617, 8.507059e+37
    %v1619 = vand.u32 %v1607, 2147483648
    %v1620 = vor.u32 1.1754944e-38, %v1619
    %v1621 = vsel %vm1618, %v1620, %v1616
    %v1622 = vmul.f32 1.0, %v1621
    %v1624 = vrot.slane %v1584, 6
    %v1626 = vadd.f32 %v870, %v1624
    %v1627 = vxor.u32 %v1626, 2147483648
    %v1628 = vmul.f32 %v1627, 1.442695
    %v1629 = vpow.pop %v1628
    %v1630 = vadd.f32 %v1629, 1.0
    %v1631 = vrcp.pop %v1630
    %v1632 = vmul.f32 %v1630, %v1631
    %v1633 = vsub.f32 1.0, %v1632
    %v1634 = vmul.f32 %v1631, %v1633
    %v1635 = vadd.f32 %v1631, %v1634
    %vm1636 = vweird.f32 %v1630
    %vm1637 = vweird.f32 %v1631
    %vm1638 = vmor %vm1636, %vm1637
    %v1639 = vsel %vm1638, %v1631, %v1635
    %v1640 = vand.u32 2147483647, %v1630
    %vm1641 = vcmp.eq.f32.partialorder %v1640, 8.507059e+37
    %v1642 = vand.u32 %v1630, 2147483648
    %v1643 = vor.u32 1.1754944e-38, %v1642
    %v1644 = vsel %vm1641, %v1643, %v1639
    %v1645 = vmul.f32 1.0, %v1644
    %v1647 = vrot.slane %v1597, 6
    %v1649 = vmul.f32 %v1622, %v1647
    %v1650 = vadd.f32 %v887, %v1649
    %v1651 = vtanh.pop %v1650
    %v1652 = vsub.f32 1.0, %v1645
    %v1653 = vmul.f32 %v1652, %v1651
    %v1655 = vrot.slane %v1559, 6
    %v1657 = vmul.f32 %v1645, %v1655
    %v1658 = vadd.f32 %v1653, %v1657
    %v1659 = vpack.c.bf16 %v1658, %v1658
    %v1661 = vrot.slane %v1659, 1
    %1663 = vmatpush.bf16.msra.mxu0 %v1051
    %1664 = vmatpush.bf16.msra.mxu0 %v1048
    %1665 = vmatpush.bf16.msra.mxu0 %v1045
    %1666 = vmatpush.bf16.msra.mxu0 %v1042
    %1667 = vmatpush.bf16.msra.mxu0 %v1039
    %1668 = vmatpush.bf16.msra.mxu0 %v1036
    %1669 = vmatpush.bf16.msra.mxu0 %v1033
    %1670 = vmatpush.bf16.msra.mxu0 %v1030
    %1671 = vmatmul.bf16.gmra.mxu0 %v1661
    %v1672 = vpop.f32.mrf.mxu0
    %v1673 = vadd.f32 %v944, %v1672
    %v1674 = vpop.f32.mrf.mxu0
    %1675 = vdwg.mxu0
    %1676 = vmatpush.bf16.msra.mxu0 %v1052
    %1677 = vmatpush.bf16.msra.mxu0 %v1049
    %1678 = vmatpush.bf16.msra.mxu0 %v1046
    %1679 = vmatpush.bf16.msra.mxu0 %v1043
    %1680 = vmatpush.bf16.msra.mxu0 %v1040
    %1681 = vmatpush.bf16.msra.mxu0 %v1037
    %1682 = vmatpush.bf16.msra.mxu0 %v1034
    %1683 = vmatpush.bf16.msra.mxu0 %v1031
    %1684 = vmatmul.bf16.gmra.mxu0 %v1661
    %v1685 = vpop.f32.mrf.mxu0
    %v1686 = vadd.f32 %v945, %v1685
    %v1687 = vpop.f32.mrf.mxu0
    %1688 = vdwg.mxu0
    %1689 = vmatpush.bf16.msra.mxu0 %v1053
    %1690 = vmatpush.bf16.msra.mxu0 %v1050
    %1691 = vmatpush.bf16.msra.mxu0 %v1047
    %1692 = vmatpush.bf16.msra.mxu0 %v1044
    %1693 = vmatpush.bf16.msra.mxu0 %v1041
    %1694 = vmatpush.bf16.msra.mxu0 %v1038
    %1695 = vmatpush.bf16.msra.mxu0 %v1035
    %1696 = vmatpush.bf16.msra.mxu0 %v1032
    %1697 = vmatmul.bf16.gmra.mxu0 %v1661
    %v1698 = vpop.f32.mrf.mxu0
    %v1699 = vadd.f32 %v946, %v1698
    %v1700 = vpop.f32.mrf.mxu0
    %1701 = vdwg.mxu0
    %v1703 = vrot.slane %v1673, 4
    %v1705 = vadd.f32 %v853, %v1703
    %v1706 = vxor.u32 %v1705, 2147483648
    %v1707 = vmul.f32 %v1706, 1.442695
    %v1708 = vpow.pop %v1707
    %v1709 = vadd.f32 %v1708, 1.0
    %v1710 = vrcp.pop %v1709
    %v1711 = vmul.f32 %v1709, %v1710
    %v1712 = vsub.f32 1.0, %v1711
    %v1713 = vmul.f32 %v1710, %v1712
    %v1714 = vadd.f32 %v1710, %v1713
    %vm1715 = vweird.f32 %v1709
    %vm1716 = vweird.f32 %v1710
    %vm1717 = vmor %vm1715, %vm1716
    %v1718 = vsel %vm1717, %v1710, %v1714
    %v1719 = vand.u32 2147483647, %v1709
    %vm1720 = vcmp.eq.f32.partialorder %v1719, 8.507059e+37
    %v1721 = vand.u32 %v1709, 2147483648
    %v1722 = vor.u32 1.1754944e-38, %v1721
    %v1723 = vsel %vm1720, %v1722, %v1718
    %v1724 = vmul.f32 1.0, %v1723
    %v1726 = vrot.slane %v1686, 4
    %v1728 = vadd.f32 %v870, %v1726
    %v1729 = vxor.u32 %v1728, 2147483648
    %v1730 = vmul.f32 %v1729, 1.442695
    %v1731 = vpow.pop %v1730
    %v1732 = vadd.f32 %v1731, 1.0
    %v1733 = vrcp.pop %v1732
    %v1734 = vmul.f32 %v1732, %v1733
    %v1735 = vsub.f32 1.0, %v1734
    %v1736 = vmul.f32 %v1733, %v1735
    %v1737 = vadd.f32 %v1733, %v1736
    %vm1738 = vweird.f32 %v1732
    %vm1739 = vweird.f32 %v1733
    %vm1740 = vmor %vm1738, %vm1739
    %v1741 = vsel %vm1740, %v1733, %v1737
    %v1742 = vand.u32 2147483647, %v1732
    %vm1743 = vcmp.eq.f32.partialorder %v1742, 8.507059e+37
    %v1744 = vand.u32 %v1732, 2147483648
    %v1745 = vor.u32 1.1754944e-38, %v1744
    %v1746 = vsel %vm1743, %v1745, %v1741
    %v1747 = vmul.f32 1.0, %v1746
    %v1749 = vrot.slane %v1699, 4
    %v1751 = vmul.f32 %v1724, %v1749
    %v1752 = vadd.f32 %v887, %v1751
    %v1753 = vtanh.pop %v1752
    %v1754 = vsub.f32 1.0, %v1747
    %v1755 = vmul.f32 %v1754, %v1753
    %v1757 = vrot.slane %v1658, 6
    %v1759 = vmul.f32 %v1747, %v1757
    %v1760 = vadd.f32 %v1755, %v1759
    %v1761 = vpack.c.bf16 %v1760, %v1760
    %v1763 = vrot.slane %v1761, 2
    %1765 = vmatpush.bf16.msra.mxu0 %v1051
    %1766 = vmatpush.bf16.msra.mxu0 %v1048
    %1767 = vmatpush.bf16.msra.mxu0 %v1045
    %1768 = vmatpush.bf16.msra.mxu0 %v1042
    %1769 = vmatpush.bf16.msra.mxu0 %v1039
    %1770 = vmatpush.bf16.msra.mxu0 %v1036
    %1771 = vmatpush.bf16.msra.mxu0 %v1033
    %1772 = vmatpush.bf16.msra.mxu0 %v1030
    %1773 = vmatmul.bf16.gmra.mxu0 %v1763
    %v1774 = vpop.f32.mrf.mxu0
    %v1775 = vadd.f32 %v944, %v1774
    %v1776 = vpop.f32.mrf.mxu0
    %1777 = vdwg.mxu0
    %1778 = vmatpush.bf16.msra.mxu0 %v1052
    %1779 = vmatpush.bf16.msra.mxu0 %v1049
    %1780 = vmatpush.bf16.msra.mxu0 %v1046
    %1781 = vmatpush.bf16.msra.mxu0 %v1043
    %1782 = vmatpush.bf16.msra.mxu0 %v1040
    %1783 = vmatpush.bf16.msra.mxu0 %v1037
    %1784 = vmatpush.bf16.msra.mxu0 %v1034
    %1785 = vmatpush.bf16.msra.mxu0 %v1031
    %1786 = vmatmul.bf16.gmra.mxu0 %v1763
    %v1787 = vpop.f32.mrf.mxu0
    %v1788 = vadd.f32 %v945, %v1787
    %v1789 = vpop.f32.mrf.mxu0
    %1790 = vdwg.mxu0
    %1791 = vmatpush.bf16.msra.mxu0 %v1053
    %1792 = vmatpush.bf16.msra.mxu0 %v1050
    %1793 = vmatpush.bf16.msra.mxu0 %v1047
    %1794 = vmatpush.bf16.msra.mxu0 %v1044
    %1795 = vmatpush.bf16.msra.mxu0 %v1041
    %1796 = vmatpush.bf16.msra.mxu0 %v1038
    %1797 = vmatpush.bf16.msra.mxu0 %v1035
    %1798 = vmatpush.bf16.msra.mxu0 %v1032
    %1799 = vmatmul.bf16.gmra.mxu0 %v1763
    %v1800 = vpop.f32.mrf.mxu0
    %v1801 = vadd.f32 %v946, %v1800
    %v1802 = vpop.f32.mrf.mxu0
    %1803 = vdwg.mxu0
    %v1805 = vrot.slane %v1775, 2
    %v1807 = vadd.f32 %v853, %v1805
    %v1808 = vxor.u32 %v1807, 2147483648
    %v1809 = vmul.f32 %v1808, 1.442695
    %v1810 = vpow.pop %v1809
    %v1811 = vadd.f32 %v1810, 1.0
    %v1812 = vrcp.pop %v1811
    %v1813 = vmul.f32 %v1811, %v1812
    %v1814 = vsub.f32 1.0, %v1813
    %v1815 = vmul.f32 %v1812, %v1814
    %v1816 = vadd.f32 %v1812, %v1815
    %vm1817 = vweird.f32 %v1811
    %vm1818 = vweird.f32 %v1812
    %vm1819 = vmor %vm1817, %vm1818
    %v1820 = vsel %vm1819, %v1812, %v1816
    %v1821 = vand.u32 2147483647, %v1811
    %vm1822 = vcmp.eq.f32.partialorder %v1821, 8.507059e+37
    %v1823 = vand.u32 %v1811, 2147483648
    %v1824 = vor.u32 1.1754944e-38, %v1823
    %v1825 = vsel %vm1822, %v1824, %v1820
    %v1826 = vmul.f32 1.0, %v1825
    %v1828 = vrot.slane %v1788, 2
    %v1830 = vadd.f32 %v870, %v1828
    %v1831 = vxor.u32 %v1830, 2147483648
    %v1832 = vmul.f32 %v1831, 1.442695
    %v1833 = vpow.pop %v1832
    %v1834 = vadd.f32 %v1833, 1.0
    %v1835 = vrcp.pop %v1834
    %v1836 = vmul.f32 %v1834, %v1835
    %v1837 = vsub.f32 1.0, %v1836
    %v1838 = vmul.f32 %v1835, %v1837
    %v1839 = vadd.f32 %v1835, %v1838
    %vm1840 = vweird.f32 %v1834
    %vm1841 = vweird.f32 %v1835
    %vm1842 = vmor %vm1840, %vm1841
    %v1843 = vsel %vm1842, %v1835, %v1839
    %v1844 = vand.u32 2147483647, %v1834
    %vm1845 = vcmp.eq.f32.partialorder %v1844, 8.507059e+37
    %v1846 = vand.u32 %v1834, 2147483648
    %v1847 = vor.u32 1.1754944e-38, %v1846
    %v1848 = vsel %vm1845, %v1847, %v1843
    %v1849 = vmul.f32 1.0, %v1848
    %v1851 = vrot.slane %v1801, 2
    %v1853 = vmul.f32 %v1826, %v1851
    %v1854 = vadd.f32 %v887, %v1853
    %v1855 = vtanh.pop %v1854
    %v1856 = vsub.f32 1.0, %v1849
    %v1857 = vmul.f32 %v1856, %v1855
    %v1859 = vrot.slane %v1760, 6
    %v1861 = vmul.f32 %v1849, %v1859
    %v1862 = vadd.f32 %v1857, %v1861
    %vm1863 = vcmask 1041408
    %v1864 = vsel %vm1863, %v1163, %v1262
    %v1865 = vsel %vm626, %v1864, %v1364
    %vm1866 = vcmask 1045504
    %v1867 = vsel %vm1866, %v1865, %v1466
    %v1868 = vsel %vm1863, %v1559, %v1658
    %v1869 = vsel %vm626, %v1868, %v1760
    %v1870 = vsel %vm1866, %v1869, %v1862
    %1871 = vst [vmem:[#allocation2] sm:$0xff] %v1867
    %1872 = vst [vmem:[#allocation2 + $0x8] sm:$0xff] %v1870
    %v1873 = vpack.c.bf16 %v1862, %v1862
    %v1874 = vld [vmem:[%s7] sm:$0xf]
    %v1875 = vld [vmem:[%s7 + $0x4] sm:$0xf]
    %v1876 = vld [vmem:[%s7 + $0x8] sm:$0xf]
    %v1877 = vld [vmem:[%s7 + $0xc] sm:$0xf]
    %v1878 = vld [vmem:[%s7 + $0x10] sm:$0xf]
    %v1879 = vld [vmem:[%s7 + $0x14] sm:$0xf]
    %v1880 = vld [vmem:[%s7 + $0x18] sm:$0xf]
    %v1881 = vld [vmem:[%s7 + $0x1c] sm:$0xf]
    %v1882 = vld [vmem:[%s7 + $0x20] sm:$0xf]
    %v1883 = vld [vmem:[%s7 + $0x24] sm:$0xf]
    %v1884 = vld [vmem:[%s7 + $0x28] sm:$0xf]
    %v1885 = vld [vmem:[%s7 + $0x2c] sm:$0xf]
    %v1886 = vld [vmem:[%s7 + $0x30] sm:$0xf]
    %v1887 = vld [vmem:[%s7 + $0x34] sm:$0xf]
    %v1888 = vld [vmem:[%s7 + $0x38] sm:$0xf]
    %v1889 = vld [vmem:[%s7 + $0x3c] sm:$0xf]
    %v1890 = vld [vmem:[%s8] sm:$0x1]
    %v1892 = vperm.slane %v1890, 0
    %v1895 = vrot.slane %v1873, 3
    %v1913 = vunpack.c.l.b16 %v1874
    %v1914 = vunpack.c.l.b16 %v1875
    %v1915 = vunpack.c.l.b16 %v1876
    %v1916 = vunpack.c.l.b16 %v1877
    %v1917 = vunpack.c.l.b16 %v1878
    %v1918 = vunpack.c.l.b16 %v1879
    %v1919 = vunpack.c.l.b16 %v1880
    %v1920 = vunpack.c.l.b16 %v1881
    %v1921 = vunpack.c.l.b16 %v1882
    %v1922 = vunpack.c.l.b16 %v1883
    %v1923 = vunpack.c.l.b16 %v1884
    %v1924 = vunpack.c.l.b16 %v1885
    %v1925 = vunpack.c.l.b16 %v1886
    %v1926 = vunpack.c.l.b16 %v1887
    %v1927 = vunpack.c.l.b16 %v1888
    %v1928 = vunpack.c.l.b16 %v1889
    %v1929 = vpack.c.b16 %v1914, %v1913
    %v1930 = vpack.c.b16 %v1916, %v1915
    %v1931 = vpack.c.b16 %v1918, %v1917
    %v1932 = vpack.c.b16 %v1920, %v1919
    %v1933 = vpack.c.b16 %v1922, %v1921
    %v1934 = vpack.c.b16 %v1924, %v1923
    %v1935 = vpack.c.b16 %v1926, %v1925
    %v1936 = vpack.c.b16 %v1928, %v1927
    %1945 = vmatpush.bf16.msra.mxu0 %v1936
    %1946 = vmatpush.bf16.msra.mxu0 %v1935
    %1947 = vmatpush.bf16.msra.mxu0 %v1934
    %1948 = vmatpush.bf16.msra.mxu0 %v1933
    %1949 = vmatpush.bf16.msra.mxu0 %v1932
    %1950 = vmatpush.bf16.msra.mxu0 %v1931
    %1951 = vmatpush.bf16.msra.mxu0 %v1930
    %1952 = vmatpush.bf16.msra.mxu0 %v1929
    %1953 = vmatmul.bf16.gmra.mxu0 %v1895
    %v1954 = vpop.f32.mrf.mxu0
    %v1955 = vadd.f32 %v1892, %v1954
    %v1956 = vpop.f32.mrf.mxu0
    %1957 = vdwg.mxu0
    %1958 = vst [vmem:[#allocation4] sm:$0x3] %v1955
    // Predicated region
    $region38: #{tpu_custom_call.1} parent=1 // pred_check
      _
    $region39: #{tpu_custom_call.1} parent=1 // pred_check_branch
      %1960 = sbr.rel (0) target = $region41
    $region40: #{tpu_custom_call.1} parent=1 // pred_region
      %1962 = vsyncadd [#allocation3], 0
      %s1963 = sshll.u32 [#allocation2], 4
      %s1964 = int_to_ptr.vmem [resolvable:$true] %s1963
      %s1965 = sshll.u32 %s9, 4
      %s1966 = int_to_ptr.hbm [resolvable:$true] %s1965
      %1971 = dma.vmem_to_hbm [thread:$0]  %s1964, 256, %s1966, [#allocation3], 128, 128, 8
    $region41: #{tpu_custom_call.1} parent=1 // pred_fallthru
      _
    // Predicated region
    $region42: #{tpu_custom_call.1} parent=1 // pred_check
      _
    $region43: #{tpu_custom_call.1} parent=1 // pred_check_branch
      %1973 = sbr.rel (0) target = $region45
    $region44: #{tpu_custom_call.1} parent=1 // pred_region
      %1975 = vsyncadd [#allocation5], 0
      %s1977 = sshll.u32 [#allocation4], 4
      %s1978 = int_to_ptr.vmem [resolvable:$true] %s1977
      %s1979 = sshll.u32 %s10, 4
      %s1980 = int_to_ptr.hbm [resolvable:$true] %s1979
      %1982 = dma.vmem_to_hbm [thread:$0]  %s1978, 32, %s1980, [#allocation5]
    $region45: #{tpu_custom_call.1} parent=1 // pred_fallthru
      _
    // Predicated region
    $region46: #{tpu_custom_call.1} parent=1 // pred_check
      _
    $region47: #{tpu_custom_call.1} parent=1 // pred_check_branch
      %1984 = sbr.rel (0) target = $region49
    $region48: #{tpu_custom_call.1} parent=1 // pred_region
      %1986 = dma.done [#allocation3], 256
    $region49: #{tpu_custom_call.1} parent=1 // pred_fallthru
      _
    // Predicated region
    $region50: #{tpu_custom_call.1} parent=1 // pred_check
      _
    $region51: #{tpu_custom_call.1} parent=1 // pred_check_branch
      %1988 = sbr.rel (0) target = $region53
    $region52: #{tpu_custom_call.1} parent=1 // pred_region
      %1990 = dma.done [#allocation5], 32
    $region53: #{tpu_custom_call.1} parent=1 // pred_fallthru
      _
    %1991 = vsyncpa [#allocation3], 1
    %1992 = vsyncpa [#allocation5], 1

</llo_original>
